<compile_context>
chip_gen: v7x
topology: tpu7x:2x2x1
jax: 0.10.0
libtpu: 0.0.40
codegen_flags: <defaults>
</compile_context>

<pallas_src>
import functools

import jax
import jax.numpy as jnp
from jax.experimental import pallas as pl
from jax.experimental.pallas import tpu as pltpu


# Packed parameter order (weight, bias interleaved) = kernel argument order.
_PARAM_ORDER = ("ew1", "eb1", "ew2", "eb2", "ew3", "eb3",
                "pw1", "pb1", "pw2", "pb2",
                "dw1", "db1", "dw2", "db2", "dw3", "db3")


def _round_up(n, m):
    return ((n + m - 1) // m) * m


# ----------------------------- Pallas kernel --------------------------------
def _autoenc_fused_kernel(x_ref, n1_ref, n2_ref,
                          ew1, eb1, ew2, eb2, ew3, eb3,
                          pw1, pb1, pw2, pb2,
                          dw1, db1, dw2, db2, dw3, db3,
                          out_ref):
    """x/n1/n2: (TB, input_dim) f32 tiles (true feature width, no lane pad).
       Weights: bf16, each padded to its own (in, ceil128(out)); biases: f32.
       out_ref: (TB, 4*L + I) f32 lane-dense slab: z1 | z2 | p1 | p2 | x_recon
       with L = ceil128(latent_dim), I = ceil128(input_dim)."""
    tb = x_ref.shape[0]
    L = eb3.shape[1]
    I = db3.shape[1]

    def linear(h, w_ref, b_ref, relu):
        # bf16 MXU operands, f32 accumulation; bias/ReLU in f32.
        y = jnp.dot(h.astype(w_ref.dtype), w_ref[...],
                    preferred_element_type=jnp.float32) + b_ref[...]
        return jnp.maximum(y, 0.0) if relu else y

    # DataAugmenter adds (noise precomputed) + row stack, all in VMEM.
    x = x_ref[...]
    h = jnp.concatenate([x + n1_ref[...], x + n2_ref[...], x], axis=0)   # (3*TB, in)

    # Encoder: ONE batched pass over [x1; x2; x].
    h = linear(h, ew1, eb1, True)
    h = linear(h, ew2, eb2, True)
    z_all = linear(h, ew3, eb3, False)                    # (3*TB, L): [z1; z2; z]

    # Projection head: ONE batched pass over [z1; z2].
    g = linear(z_all[: 2 * tb], pw1, pb1, True)
    p_all = linear(g, pw2, pb2, False)                    # (2*TB, L): [p1; p2]

    # Decoder on the clean encoding z.
    d = linear(z_all[2 * tb:], dw1, db1, True)
    d = linear(d, dw2, db2, True)
    x_recon = linear(d, dw3, db3, False)                  # (TB, I)

    # Single lane-dense output slab; every segment is 128-aligned -> unmasked
    # stores and one write-back DMA per grid step.
    out_ref[:, 0 * L: 1 * L] = z_all[0 * tb: 1 * tb]
    out_ref[:, 1 * L: 2 * L] = z_all[1 * tb: 2 * tb]
    out_ref[:, 2 * L: 3 * L] = p_all[0 * tb: 1 * tb]
    out_ref[:, 3 * L: 4 * L] = p_all[1 * tb: 2 * tb]
    out_ref[:, 4 * L: 4 * L + I] = x_recon


# ----------------------------- Param packing (done once) ---------------------
def pack_params(params, compute_dtype=jnp.bfloat16):
    """Pad every weight/bias to its own lane-aligned shape and cast weights to
    bf16.  Call ONCE at parameter-preparation time, outside the jitted fwd."""
    input_dim, hidden_dim = params["ew1"].shape
    latent_dim = params["ew3"].shape[1]
    H = _round_up(hidden_dim, 128)
    L = _round_up(latent_dim, 128)
    I = _round_up(input_dim, 128)

    def w(name, rows, cols):
        a = params[name]
        return jnp.pad(a, ((0, rows - a.shape[0]),
                           (0, cols - a.shape[1]))).astype(compute_dtype)

    def b(name, cols):
        a = params[name]
        return jnp.pad(a, ((0, 0), (0, cols - a.shape[1]))).astype(jnp.float32)

    return {
        "ew1": w("ew1", input_dim, H), "eb1": b("eb1", H),
        "ew2": w("ew2", H, H),         "eb2": b("eb2", H),
        "ew3": w("ew3", H, L),         "eb3": b("eb3", L),
        "pw1": w("pw1", L, H),         "pb1": b("pb1", H),
        "pw2": w("pw2", H, L),         "pb2": b("pb2", L),
        "dw1": w("dw1", L, H),         "db1": b("db1", H),
        "dw2": w("dw2", H, H),         "db2": b("db2", H),
        "dw3": w("dw3", H, I),         "db3": b("db3", I),
    }


# ----------------------------- JAX wrapper -----------------------------------
@functools.partial(jax.jit, static_argnames=("latent_dim",))
def enhanced_autoencoder_forward(x, noise1, noise2, packed, *, latent_dim):
    """x: (B, input_dim) f32; noise1/noise2: precomputed augmentation noise;
    packed: output of pack_params()."""
    batch, input_dim = x.shape
    H = packed["ew1"].shape[1]      # ceil128(hidden_dim)
    L = packed["ew3"].shape[1]      # ceil128(latent_dim)
    I = packed["dw3"].shape[1]      # ceil128(input_dim)
    out_w = 4 * L + I

    # Batch-tiling policy: tight padding, big tiles to amortize per-step
    # overhead, and >= 2 parallel tiles at large batch for v7x megacore.
    TB_MAX = 1024
    n_tiles = max(1, -(-batch // TB_MAX))
    if n_tiles == 1 and batch >= 512:
        n_tiles = 2
    TB = _round_up(-(-batch // n_tiles), 8)
    padded_batch = TB * n_tiles

    pad = padded_batch - batch            # no-op when batch % TB == 0
    x_p = jnp.pad(x, ((0, pad), (0, 0)))
    n1_p = jnp.pad(noise1, ((0, pad), (0, 0)))
    n2_p = jnp.pad(noise2, ((0, pad), (0, 0)))

    # Inputs keep their true feature width (full-array last dim is legal).
    data_spec = pl.BlockSpec((TB, input_dim), lambda i: (i, 0))
    # Resident weights/biases: full-array blocks, constant index_map -> one DMA.
    const_specs = [pl.BlockSpec(packed[k].shape, lambda i: (0, 0))
                   for k in _PARAM_ORDER]

    # Advisory cost for XLA's scheduler (actual padded work).
    flops = 2 * padded_batch * (3 * (input_dim * H + H * H + H * L)
                                + 2 * (L * H + H * L)
                                + 1 * (L * H + H * H + H * I))
    bytes_accessed = (4 * 3 * padded_batch * input_dim
                      + sum(int(packed[k].size) * packed[k].dtype.itemsize
                            for k in _PARAM_ORDER)
                      + 4 * padded_batch * out_w)

    out = pl.pallas_call(
        _autoenc_fused_kernel,
        out_shape=jax.ShapeDtypeStruct((padded_batch, out_w), jnp.float32),
        grid_spec=pltpu.PrefetchScalarGridSpec(
            num_scalar_prefetch=0,
            grid=(n_tiles,),
            in_specs=[data_spec, data_spec, data_spec] + const_specs,
            out_specs=pl.BlockSpec((TB, out_w), lambda i: (i, 0)),
        ),
        compiler_params=pltpu.CompilerParams(
            dimension_semantics=("parallel",),
            vmem_limit_bytes=48 * 1024 * 1024,   # within v7x's 64 MiB VMEM
        ),
        cost_estimate=pl.CostEstimate(
            flops=flops, transcendentals=0, bytes_accessed=bytes_accessed),
    )(x_p, n1_p, n2_p, *[packed[k] for k in _PARAM_ORDER])

    z1 = out[:batch, 0 * L: 0 * L + latent_dim]
    z2 = out[:batch, 1 * L: 1 * L + latent_dim]
    p1 = out[:batch, 2 * L: 2 * L + latent_dim]
    p2 = out[:batch, 3 * L: 3 * L + latent_dim]
    x_recon = out[:batch, 4 * L: 4 * L + input_dim]
    return z1, z2, p1, p2, x_recon


# ----------------------------- Param init ------------------------------------
def _init_linear(key, in_dim, out_dim):
    """PyTorch-style uniform init; returns (W^T [in,out], b [1,out]) in f32."""
    kw, kb = jax.random.split(key)
    bound = 1.0 / jnp.sqrt(jnp.float32(in_dim))
    w = jax.random.uniform(kw, (in_dim, out_dim), jnp.float32, -bound, bound)
    b = jax.random.uniform(kb, (1, out_dim), jnp.float32, -bound, bound)
    return w, b


def init_params(key, input_dim, hidden_dim, latent_dim):
    keys = jax.random.split(key, 8)
    p = {}
    p["ew1"], p["eb1"] = _init_linear(keys[0], input_dim, hidden_dim)
    p["ew2"], p["eb2"] = _init_linear(keys[1], hidden_dim, hidden_dim)
    p["ew3"], p["eb3"] = _init_linear(keys[2], hidden_dim, latent_dim)
    p["dw1"], p["db1"] = _init_linear(keys[3], latent_dim, hidden_dim)
    p["dw2"], p["db2"] = _init_linear(keys[4], hidden_dim, hidden_dim)
    p["dw3"], p["db3"] = _init_linear(keys[5], hidden_dim, input_dim)
    p["pw1"], p["pb1"] = _init_linear(keys[6], latent_dim, hidden_dim)
    p["pw2"], p["pb2"] = _init_linear(keys[7], hidden_dim, latent_dim)
    return p


# ----------------------------- Pure-JAX reference ----------------------------
def _ref_forward(x, n1, n2, p):
    def lin(h, w, b):
        return h @ w + b

    def enc(h):
        h = jax.nn.relu(lin(h, p["ew1"], p["eb1"]))
        h = jax.nn.relu(lin(h, p["ew2"], p["eb2"]))
        return lin(h, p["ew3"], p["eb3"])

    def proj(h):
        h = jax.nn.relu(lin(h, p["pw1"], p["pb1"]))
        return lin(h, p["pw2"], p["pb2"])

    def dec(h):
        h = jax.nn.relu(lin(h, p["dw1"], p["db1"]))
        h = jax.nn.relu(lin(h, p["dw2"], p["db2"]))
        return lin(h, p["dw3"], p["db3"])

    x1, x2 = x + n1, x + n2
    z1, z2, z = enc(x1), enc(x2), enc(x)
    return z1, z2, proj(z1), proj(z2), dec(z)


if __name__ == "__main__":
    batch, input_dim, hidden_dim, latent_dim = 8, 32, 32, 16
    translation_range, noise_std = 0.1, 0.05

    root = jax.random.PRNGKey(0)
    k_x, k_params, k_t1, k_g1, k_t2, k_g2 = jax.random.split(root, 6)

    x = jax.random.normal(k_x, (batch, input_dim), jnp.float32)
    params = init_params(k_params, input_dim, hidden_dim, latent_dim)
    packed = pack_params(params)          # packed ONCE, outside the forward

    # DataAugmenter noise (randn*translation + randn*noise_std), precomputed
    # deterministically; the adds themselves are fused into the kernel.
    noise1 = (jax.random.normal(k_t1, x.shape) * translation_range
              + jax.random.normal(k_g1, x.shape) * noise_std)
    noise2 = (jax.random.normal(k_t2, x.shape) * translation_range
              + jax.random.normal(k_g2, x.shape) * noise_std)

    z1, z2, p1, p2, x_recon = enhanced_autoencoder_forward(
        x, noise1, noise2, packed, latent_dim=latent_dim)
    jax.block_until_ready((z1, z2, p1, p2, x_recon))

    # Shapes match the PyTorch module's outputs.
    assert z1.shape == (batch, latent_dim)
    assert z2.shape == (batch, latent_dim)
    assert p1.shape == (batch, latent_dim)
    assert p2.shape == (batch, latent_dim)
    assert x_recon.shape == (batch, input_dim)

    # Numerical check against an f32 pure-JAX reference.  Kernel uses bf16
    # matmul operands with f32 accumulation -> loosened tolerance.
    r1, r2, rp1, rp2, rxr = _ref_forward(x, noise1, noise2, params)
    for got, ref in ((z1, r1), (z2, r2), (p1, rp1), (p2, rp2), (x_recon, rxr)):
        assert jnp.allclose(got, ref, atol=5e-2, rtol=5e-2)

    print("KERNEL_OK")
</pallas_src>

<mosaic_0001>
module attributes {stable_mosaic.version = 11 : i64} {
  func.func @_autoenc_fused_kernel(%arg0: i32, %arg1: memref<8x32xf32, #tpu.memory_space<vmem>>, %arg2: memref<8x32xf32, #tpu.memory_space<vmem>>, %arg3: memref<8x32xf32, #tpu.memory_space<vmem>>, %arg4: memref<32x128xbf16, #tpu.memory_space<vmem>>, %arg5: memref<1x128xf32, #tpu.memory_space<vmem>>, %arg6: memref<128x128xbf16, #tpu.memory_space<vmem>>, %arg7: memref<1x128xf32, #tpu.memory_space<vmem>>, %arg8: memref<128x128xbf16, #tpu.memory_space<vmem>>, %arg9: memref<1x128xf32, #tpu.memory_space<vmem>>, %arg10: memref<128x128xbf16, #tpu.memory_space<vmem>>, %arg11: memref<1x128xf32, #tpu.memory_space<vmem>>, %arg12: memref<128x128xbf16, #tpu.memory_space<vmem>>, %arg13: memref<1x128xf32, #tpu.memory_space<vmem>>, %arg14: memref<128x128xbf16, #tpu.memory_space<vmem>>, %arg15: memref<1x128xf32, #tpu.memory_space<vmem>>, %arg16: memref<128x128xbf16, #tpu.memory_space<vmem>>, %arg17: memref<1x128xf32, #tpu.memory_space<vmem>>, %arg18: memref<128x128xbf16, #tpu.memory_space<vmem>>, %arg19: memref<1x128xf32, #tpu.memory_space<vmem>>, %arg20: memref<8x640xf32, #tpu.memory_space<vmem>>) attributes {dimension_semantics = [#tpu.dimension_semantics<parallel>], iteration_bounds = array<i64: 1>, scalar_prefetch = 0 : i64, scratch_operands = 0 : i64, tpu.core_type = #tpu.core_type<tc>, window_params = [{transform_indices = @transform_0, window_bounds = array<i64: 8, 32>}, {transform_indices = @transform_1, window_bounds = array<i64: 8, 32>}, {transform_indices = @transform_2, window_bounds = array<i64: 8, 32>}, {pipeline_mode = #tpu.pipeline_mode<synchronous>, transform_indices = @transform_3, window_bounds = array<i64: 32, 128>}, {pipeline_mode = #tpu.pipeline_mode<synchronous>, transform_indices = @transform_4, window_bounds = array<i64: 1, 128>}, {pipeline_mode = #tpu.pipeline_mode<synchronous>, transform_indices = @transform_5, window_bounds = array<i64: 128, 128>}, {pipeline_mode = #tpu.pipeline_mode<synchronous>, transform_indices = @transform_6, window_bounds = array<i64: 1, 128>}, {pipeline_mode = #tpu.pipeline_mode<synchronous>, transform_indices = @transform_7, window_bounds = array<i64: 128, 128>}, {pipeline_mode = #tpu.pipeline_mode<synchronous>, transform_indices = @transform_8, window_bounds = array<i64: 1, 128>}, {pipeline_mode = #tpu.pipeline_mode<synchronous>, transform_indices = @transform_9, window_bounds = array<i64: 128, 128>}, {pipeline_mode = #tpu.pipeline_mode<synchronous>, transform_indices = @transform_10, window_bounds = array<i64: 1, 128>}, {pipeline_mode = #tpu.pipeline_mode<synchronous>, transform_indices = @transform_11, window_bounds = array<i64: 128, 128>}, {pipeline_mode = #tpu.pipeline_mode<synchronous>, transform_indices = @transform_12, window_bounds = array<i64: 1, 128>}, {pipeline_mode = #tpu.pipeline_mode<synchronous>, transform_indices = @transform_13, window_bounds = array<i64: 128, 128>}, {pipeline_mode = #tpu.pipeline_mode<synchronous>, transform_indices = @transform_14, window_bounds = array<i64: 1, 128>}, {pipeline_mode = #tpu.pipeline_mode<synchronous>, transform_indices = @transform_15, window_bounds = array<i64: 128, 128>}, {pipeline_mode = #tpu.pipeline_mode<synchronous>, transform_indices = @transform_16, window_bounds = array<i64: 1, 128>}, {pipeline_mode = #tpu.pipeline_mode<synchronous>, transform_indices = @transform_17, window_bounds = array<i64: 128, 128>}, {pipeline_mode = #tpu.pipeline_mode<synchronous>, transform_indices = @transform_18, window_bounds = array<i64: 1, 128>}, {transform_indices = @transform_19, window_bounds = array<i64: 8, 640>}]} {
    %c0 = arith.constant 0 : index
    %c0_0 = arith.constant 0 : index
    %0 = vector.load %arg1[%c0, %c0_0] : memref<8x32xf32, #tpu.memory_space<vmem>>, vector<8x32xf32>
    %c0_1 = arith.constant 0 : index
    %c0_2 = arith.constant 0 : index
    %1 = vector.load %arg2[%c0_1, %c0_2] : memref<8x32xf32, #tpu.memory_space<vmem>>, vector<8x32xf32>
    %2 = arith.addf %0, %1 : vector<8x32xf32>
    %c0_3 = arith.constant 0 : index
    %c0_4 = arith.constant 0 : index
    %3 = vector.load %arg3[%c0_3, %c0_4] : memref<8x32xf32, #tpu.memory_space<vmem>>, vector<8x32xf32>
    %4 = arith.addf %0, %3 : vector<8x32xf32>
    %5 = tpu.concatenate %2, %4, %0 in 0 : vector<8x32xf32>, vector<8x32xf32>, vector<8x32xf32> -> vector<24x32xf32>
    %6 = arith.truncf %5 : vector<24x32xf32> to vector<24x32xbf16>
    %c0_5 = arith.constant 0 : index
    %c0_6 = arith.constant 0 : index
    %7 = vector.load %arg4[%c0_5, %c0_6] : memref<32x128xbf16, #tpu.memory_space<vmem>>, vector<32x128xbf16>
    %cst = arith.constant dense<0.000000e+00> : vector<24x128xf32>
    %8 = tpu.matmul %6, %7, %cst {dimension_numbers = #tpu.dot_dimension_numbers<[1], [0], [0], [1], [0, 0, 1, 1], [], []>} : vector<24x32xbf16>, vector<32x128xbf16>, vector<24x128xf32> -> vector<24x128xf32>
    %c0_7 = arith.constant 0 : index
    %c0_8 = arith.constant 0 : index
    %9 = vector.load %arg5[%c0_7, %c0_8] : memref<1x128xf32, #tpu.memory_space<vmem>>, vector<1x128xf32>
    %10 = vector.broadcast %9 : vector<1x128xf32> to vector<24x128xf32>
    %11 = arith.addf %8, %10 : vector<24x128xf32>
    %cst_9 = arith.constant 0.000000e+00 : f32
    %12 = vector.broadcast %cst_9 : f32 to vector<24x128xf32>
    %13 = arith.maximumf %11, %12 : vector<24x128xf32>
    %14 = arith.truncf %13 : vector<24x128xf32> to vector<24x128xbf16>
    %c0_10 = arith.constant 0 : index
    %c0_11 = arith.constant 0 : index
    %15 = vector.load %arg6[%c0_10, %c0_11] : memref<128x128xbf16, #tpu.memory_space<vmem>>, vector<128x128xbf16>
    %cst_12 = arith.constant dense<0.000000e+00> : vector<24x128xf32>
    %16 = tpu.matmul %14, %15, %cst_12 {dimension_numbers = #tpu.dot_dimension_numbers<[1], [0], [0], [1], [0, 0, 1, 1], [], []>} : vector<24x128xbf16>, vector<128x128xbf16>, vector<24x128xf32> -> vector<24x128xf32>
    %c0_13 = arith.constant 0 : index
    %c0_14 = arith.constant 0 : index
    %17 = vector.load %arg7[%c0_13, %c0_14] : memref<1x128xf32, #tpu.memory_space<vmem>>, vector<1x128xf32>
    %18 = vector.broadcast %17 : vector<1x128xf32> to vector<24x128xf32>
    %19 = arith.addf %16, %18 : vector<24x128xf32>
    %cst_15 = arith.constant 0.000000e+00 : f32
    %20 = vector.broadcast %cst_15 : f32 to vector<24x128xf32>
    %21 = arith.maximumf %19, %20 : vector<24x128xf32>
    %22 = arith.truncf %21 : vector<24x128xf32> to vector<24x128xbf16>
    %c0_16 = arith.constant 0 : index
    %c0_17 = arith.constant 0 : index
    %23 = vector.load %arg8[%c0_16, %c0_17] : memref<128x128xbf16, #tpu.memory_space<vmem>>, vector<128x128xbf16>
    %cst_18 = arith.constant dense<0.000000e+00> : vector<24x128xf32>
    %24 = tpu.matmul %22, %23, %cst_18 {dimension_numbers = #tpu.dot_dimension_numbers<[1], [0], [0], [1], [0, 0, 1, 1], [], []>} : vector<24x128xbf16>, vector<128x128xbf16>, vector<24x128xf32> -> vector<24x128xf32>
    %c0_19 = arith.constant 0 : index
    %c0_20 = arith.constant 0 : index
    %25 = vector.load %arg9[%c0_19, %c0_20] : memref<1x128xf32, #tpu.memory_space<vmem>>, vector<1x128xf32>
    %26 = vector.broadcast %25 : vector<1x128xf32> to vector<24x128xf32>
    %27 = arith.addf %24, %26 : vector<24x128xf32>
    %28 = vector.extract_strided_slice %27 {offsets = [0, 0], sizes = [16, 128], strides = [1, 1]} : vector<24x128xf32> to vector<16x128xf32>
    %29 = arith.truncf %28 : vector<16x128xf32> to vector<16x128xbf16>
    %c0_21 = arith.constant 0 : index
    %c0_22 = arith.constant 0 : index
    %30 = vector.load %arg10[%c0_21, %c0_22] : memref<128x128xbf16, #tpu.memory_space<vmem>>, vector<128x128xbf16>
    %cst_23 = arith.constant dense<0.000000e+00> : vector<16x128xf32>
    %31 = tpu.matmul %29, %30, %cst_23 {dimension_numbers = #tpu.dot_dimension_numbers<[1], [0], [0], [1], [0, 0, 1, 1], [], []>} : vector<16x128xbf16>, vector<128x128xbf16>, vector<16x128xf32> -> vector<16x128xf32>
    %c0_24 = arith.constant 0 : index
    %c0_25 = arith.constant 0 : index
    %32 = vector.load %arg11[%c0_24, %c0_25] : memref<1x128xf32, #tpu.memory_space<vmem>>, vector<1x128xf32>
    %33 = vector.broadcast %32 : vector<1x128xf32> to vector<16x128xf32>
    %34 = arith.addf %31, %33 : vector<16x128xf32>
    %cst_26 = arith.constant 0.000000e+00 : f32
    %35 = vector.broadcast %cst_26 : f32 to vector<16x128xf32>
    %36 = arith.maximumf %34, %35 : vector<16x128xf32>
    %37 = arith.truncf %36 : vector<16x128xf32> to vector<16x128xbf16>
    %c0_27 = arith.constant 0 : index
    %c0_28 = arith.constant 0 : index
    %38 = vector.load %arg12[%c0_27, %c0_28] : memref<128x128xbf16, #tpu.memory_space<vmem>>, vector<128x128xbf16>
    %cst_29 = arith.constant dense<0.000000e+00> : vector<16x128xf32>
    %39 = tpu.matmul %37, %38, %cst_29 {dimension_numbers = #tpu.dot_dimension_numbers<[1], [0], [0], [1], [0, 0, 1, 1], [], []>} : vector<16x128xbf16>, vector<128x128xbf16>, vector<16x128xf32> -> vector<16x128xf32>
    %c0_30 = arith.constant 0 : index
    %c0_31 = arith.constant 0 : index
    %40 = vector.load %arg13[%c0_30, %c0_31] : memref<1x128xf32, #tpu.memory_space<vmem>>, vector<1x128xf32>
    %41 = vector.broadcast %40 : vector<1x128xf32> to vector<16x128xf32>
    %42 = arith.addf %39, %41 : vector<16x128xf32>
    %43 = vector.extract_strided_slice %27 {offsets = [16, 0], sizes = [8, 128], strides = [1, 1]} : vector<24x128xf32> to vector<8x128xf32>
    %44 = arith.truncf %43 : vector<8x128xf32> to vector<8x128xbf16>
    %c0_32 = arith.constant 0 : index
    %c0_33 = arith.constant 0 : index
    %45 = vector.load %arg14[%c0_32, %c0_33] : memref<128x128xbf16, #tpu.memory_space<vmem>>, vector<128x128xbf16>
    %cst_34 = arith.constant dense<0.000000e+00> : vector<8x128xf32>
    %46 = tpu.matmul %44, %45, %cst_34 {dimension_numbers = #tpu.dot_dimension_numbers<[1], [0], [0], [1], [0, 0, 1, 1], [], []>} : vector<8x128xbf16>, vector<128x128xbf16>, vector<8x128xf32> -> vector<8x128xf32>
    %c0_35 = arith.constant 0 : index
    %c0_36 = arith.constant 0 : index
    %47 = vector.load %arg15[%c0_35, %c0_36] : memref<1x128xf32, #tpu.memory_space<vmem>>, vector<1x128xf32>
    %48 = vector.broadcast %47 : vector<1x128xf32> to vector<8x128xf32>
    %49 = arith.addf %46, %48 : vector<8x128xf32>
    %cst_37 = arith.constant 0.000000e+00 : f32
    %50 = vector.broadcast %cst_37 : f32 to vector<8x128xf32>
    %51 = arith.maximumf %49, %50 : vector<8x128xf32>
    %52 = arith.truncf %51 : vector<8x128xf32> to vector<8x128xbf16>
    %c0_38 = arith.constant 0 : index
    %c0_39 = arith.constant 0 : index
    %53 = vector.load %arg16[%c0_38, %c0_39] : memref<128x128xbf16, #tpu.memory_space<vmem>>, vector<128x128xbf16>
    %cst_40 = arith.constant dense<0.000000e+00> : vector<8x128xf32>
    %54 = tpu.matmul %52, %53, %cst_40 {dimension_numbers = #tpu.dot_dimension_numbers<[1], [0], [0], [1], [0, 0, 1, 1], [], []>} : vector<8x128xbf16>, vector<128x128xbf16>, vector<8x128xf32> -> vector<8x128xf32>
    %c0_41 = arith.constant 0 : index
    %c0_42 = arith.constant 0 : index
    %55 = vector.load %arg17[%c0_41, %c0_42] : memref<1x128xf32, #tpu.memory_space<vmem>>, vector<1x128xf32>
    %56 = vector.broadcast %55 : vector<1x128xf32> to vector<8x128xf32>
    %57 = arith.addf %54, %56 : vector<8x128xf32>
    %cst_43 = arith.constant 0.000000e+00 : f32
    %58 = vector.broadcast %cst_43 : f32 to vector<8x128xf32>
    %59 = arith.maximumf %57, %58 : vector<8x128xf32>
    %60 = arith.truncf %59 : vector<8x128xf32> to vector<8x128xbf16>
    %c0_44 = arith.constant 0 : index
    %c0_45 = arith.constant 0 : index
    %61 = vector.load %arg18[%c0_44, %c0_45] : memref<128x128xbf16, #tpu.memory_space<vmem>>, vector<128x128xbf16>
    %cst_46 = arith.constant dense<0.000000e+00> : vector<8x128xf32>
    %62 = tpu.matmul %60, %61, %cst_46 {dimension_numbers = #tpu.dot_dimension_numbers<[1], [0], [0], [1], [0, 0, 1, 1], [], []>} : vector<8x128xbf16>, vector<128x128xbf16>, vector<8x128xf32> -> vector<8x128xf32>
    %c0_47 = arith.constant 0 : index
    %c0_48 = arith.constant 0 : index
    %63 = vector.load %arg19[%c0_47, %c0_48] : memref<1x128xf32, #tpu.memory_space<vmem>>, vector<1x128xf32>
    %64 = vector.broadcast %63 : vector<1x128xf32> to vector<8x128xf32>
    %65 = arith.addf %62, %64 : vector<8x128xf32>
    %66 = vector.extract_strided_slice %27 {offsets = [0, 0], sizes = [8, 128], strides = [1, 1]} : vector<24x128xf32> to vector<8x128xf32>
    %c0_49 = arith.constant 0 : index
    %c0_50 = arith.constant 0 : index
    %67 = vector.load %arg20[%c0_49, %c0_50] : memref<8x640xf32, #tpu.memory_space<vmem>>, vector<8x128xf32>
    tpu.vector_store %arg20[%c0_49, %c0_50], %66 {strides = array<i32>} : memref<8x640xf32, #tpu.memory_space<vmem>>, vector<8x128xf32>,
    %68 = vector.extract_strided_slice %27 {offsets = [8, 0], sizes = [8, 128], strides = [1, 1]} : vector<24x128xf32> to vector<8x128xf32>
    %c0_51 = arith.constant 0 : index
    %c128 = arith.constant 128 : index
    %69 = vector.load %arg20[%c0_51, %c128] : memref<8x640xf32, #tpu.memory_space<vmem>>, vector<8x128xf32>
    tpu.vector_store %arg20[%c0_51, %c128], %68 {strides = array<i32>} : memref<8x640xf32, #tpu.memory_space<vmem>>, vector<8x128xf32>,
    %70 = vector.extract_strided_slice %42 {offsets = [0, 0], sizes = [8, 128], strides = [1, 1]} : vector<16x128xf32> to vector<8x128xf32>
    %c0_52 = arith.constant 0 : index
    %c256 = arith.constant 256 : index
    %71 = vector.load %arg20[%c0_52, %c256] : memref<8x640xf32, #tpu.memory_space<vmem>>, vector<8x128xf32>
    tpu.vector_store %arg20[%c0_52, %c256], %70 {strides = array<i32>} : memref<8x640xf32, #tpu.memory_space<vmem>>, vector<8x128xf32>,
    %72 = vector.extract_strided_slice %42 {offsets = [8, 0], sizes = [8, 128], strides = [1, 1]} : vector<16x128xf32> to vector<8x128xf32>
    %c0_53 = arith.constant 0 : index
    %c384 = arith.constant 384 : index
    %73 = vector.load %arg20[%c0_53, %c384] : memref<8x640xf32, #tpu.memory_space<vmem>>, vector<8x128xf32>
    tpu.vector_store %arg20[%c0_53, %c384], %72 {strides = array<i32>} : memref<8x640xf32, #tpu.memory_space<vmem>>, vector<8x128xf32>,
    %c0_54 = arith.constant 0 : index
    %c512 = arith.constant 512 : index
    %74 = vector.load %arg20[%c0_54, %c512] : memref<8x640xf32, #tpu.memory_space<vmem>>, vector<8x128xf32>
    tpu.vector_store %arg20[%c0_54, %c512], %65 {strides = array<i32>} : memref<8x640xf32, #tpu.memory_space<vmem>>, vector<8x128xf32>,
    return
  }
  func.func @transform_0(%arg0: i32) -> (i32, i32) {
    %c0_i32 = arith.constant 0 : i32
    %c0_i32_0 = arith.constant 0 : i32
    return %arg0, %c0_i32 : i32, i32
  }
  func.func @transform_1(%arg0: i32) -> (i32, i32) {
    %c0_i32 = arith.constant 0 : i32
    %c0_i32_0 = arith.constant 0 : i32
    return %arg0, %c0_i32 : i32, i32
  }
  func.func @transform_2(%arg0: i32) -> (i32, i32) {
    %c0_i32 = arith.constant 0 : i32
    %c0_i32_0 = arith.constant 0 : i32
    return %arg0, %c0_i32 : i32, i32
  }
  func.func @transform_3(%arg0: i32) -> (i32, i32) {
    %c0_i32 = arith.constant 0 : i32
    %c0_i32_0 = arith.constant 0 : i32
    %c0_i32_1 = arith.constant 0 : i32
    return %c0_i32, %c0_i32_0 : i32, i32
  }
  func.func @transform_4(%arg0: i32) -> (i32, i32) {
    %c0_i32 = arith.constant 0 : i32
    %c0_i32_0 = arith.constant 0 : i32
    %c0_i32_1 = arith.constant 0 : i32
    return %c0_i32, %c0_i32_0 : i32, i32
  }
  func.func @transform_5(%arg0: i32) -> (i32, i32) {
    %c0_i32 = arith.constant 0 : i32
    %c0_i32_0 = arith.constant 0 : i32
    %c0_i32_1 = arith.constant 0 : i32
    return %c0_i32, %c0_i32_0 : i32, i32
  }
  func.func @transform_6(%arg0: i32) -> (i32, i32) {
    %c0_i32 = arith.constant 0 : i32
    %c0_i32_0 = arith.constant 0 : i32
    %c0_i32_1 = arith.constant 0 : i32
    return %c0_i32, %c0_i32_0 : i32, i32
  }
  func.func @transform_7(%arg0: i32) -> (i32, i32) {
    %c0_i32 = arith.constant 0 : i32
    %c0_i32_0 = arith.constant 0 : i32
    %c0_i32_1 = arith.constant 0 : i32
    return %c0_i32, %c0_i32_0 : i32, i32
  }
  func.func @transform_8(%arg0: i32) -> (i32, i32) {
    %c0_i32 = arith.constant 0 : i32
    %c0_i32_0 = arith.constant 0 : i32
    %c0_i32_1 = arith.constant 0 : i32
    return %c0_i32, %c0_i32_0 : i32, i32
  }
  func.func @transform_9(%arg0: i32) -> (i32, i32) {
    %c0_i32 = arith.constant 0 : i32
    %c0_i32_0 = arith.constant 0 : i32
    %c0_i32_1 = arith.constant 0 : i32
    return %c0_i32, %c0_i32_0 : i32, i32
  }
  func.func @transform_10(%arg0: i32) -> (i32, i32) {
    %c0_i32 = arith.constant 0 : i32
    %c0_i32_0 = arith.constant 0 : i32
    %c0_i32_1 = arith.constant 0 : i32
    return %c0_i32, %c0_i32_0 : i32, i32
  }
  func.func @transform_11(%arg0: i32) -> (i32, i32) {
    %c0_i32 = arith.constant 0 : i32
    %c0_i32_0 = arith.constant 0 : i32
    %c0_i32_1 = arith.constant 0 : i32
    return %c0_i32, %c0_i32_0 : i32, i32
  }
  func.func @transform_12(%arg0: i32) -> (i32, i32) {
    %c0_i32 = arith.constant 0 : i32
    %c0_i32_0 = arith.constant 0 : i32
    %c0_i32_1 = arith.constant 0 : i32
    return %c0_i32, %c0_i32_0 : i32, i32
  }
  func.func @transform_13(%arg0: i32) -> (i32, i32) {
    %c0_i32 = arith.constant 0 : i32
    %c0_i32_0 = arith.constant 0 : i32
    %c0_i32_1 = arith.constant 0 : i32
    return %c0_i32, %c0_i32_0 : i32, i32
  }
  func.func @transform_14(%arg0: i32) -> (i32, i32) {
    %c0_i32 = arith.constant 0 : i32
    %c0_i32_0 = arith.constant 0 : i32
    %c0_i32_1 = arith.constant 0 : i32
    return %c0_i32, %c0_i32_0 : i32, i32
  }
  func.func @transform_15(%arg0: i32) -> (i32, i32) {
    %c0_i32 = arith.constant 0 : i32
    %c0_i32_0 = arith.constant 0 : i32
    %c0_i32_1 = arith.constant 0 : i32
    return %c0_i32, %c0_i32_0 : i32, i32
  }
  func.func @transform_16(%arg0: i32) -> (i32, i32) {
    %c0_i32 = arith.constant 0 : i32
    %c0_i32_0 = arith.constant 0 : i32
    %c0_i32_1 = arith.constant 0 : i32
    return %c0_i32, %c0_i32_0 : i32, i32
  }
  func.func @transform_17(%arg0: i32) -> (i32, i32) {
    %c0_i32 = arith.constant 0 : i32
    %c0_i32_0 = arith.constant 0 : i32
    %c0_i32_1 = arith.constant 0 : i32
    return %c0_i32, %c0_i32_0 : i32, i32
  }
  func.func @transform_18(%arg0: i32) -> (i32, i32) {
    %c0_i32 = arith.constant 0 : i32
    %c0_i32_0 = arith.constant 0 : i32
    %c0_i32_1 = arith.constant 0 : i32
    return %c0_i32, %c0_i32_0 : i32, i32
  }
  func.func @transform_19(%arg0: i32) -> (i32, i32) {
    %c0_i32 = arith.constant 0 : i32
    %c0_i32_0 = arith.constant 0 : i32
    return %arg0, %c0_i32 : i32, i32
  }
}

</mosaic_0001>

<llo_original>
// kernel: enhanced_autoencoder_forward.1
$region0: #{enhanced_autoencoder_forward.1}
  #allocation0 [shape = 'u32[]', space=smem, size = 0x4, offset = 0x4, fixed_abs, tag = 'smem constant byte address 0x4 - core index']
  #allocation1 [shape = 'u32[144,128]{1,0:T(1,128)}', space=vmem, size = 0x12000, scoped, tag = 'internal scratch']
  %s0 = inlined_call_operand.hbm [shape: f32[8,32], index: 0, kind: input, shape index: {}]
  %s1 = inlined_call_operand.vmem [shape: f32[8,32], index: 1, kind: input, shape index: {}]
  %s2 = inlined_call_operand.vmem [shape: f32[8,32], index: 2, kind: input, shape index: {}]
  %s3 = inlined_call_operand.vmem [shape: bf16[32,128], index: 3, kind: input, shape index: {}]
  %s4 = inlined_call_operand.vmem [shape: f32[1,128], index: 4, kind: input, shape index: {}]
  %s5 = inlined_call_operand.hbm [shape: bf16[128,128], index: 5, kind: input, shape index: {}]
  %s6 = inlined_call_operand.vmem [shape: f32[1,128], index: 6, kind: input, shape index: {}]
  %s7 = inlined_call_operand.hbm [shape: bf16[128,128], index: 7, kind: input, shape index: {}]
  %s8 = inlined_call_operand.hbm [shape: f32[1,128], index: 8, kind: input, shape index: {}]
  %s9 = inlined_call_operand.hbm [shape: bf16[128,128], index: 9, kind: input, shape index: {}]
  %s10 = inlined_call_operand.hbm [shape: f32[1,128], index: 10, kind: input, shape index: {}]
  %s11 = inlined_call_operand.hbm [shape: bf16[128,128], index: 11, kind: input, shape index: {}]
  %s12 = inlined_call_operand.hbm [shape: f32[1,128], index: 12, kind: input, shape index: {}]
  %s13 = inlined_call_operand.hbm [shape: bf16[128,128], index: 13, kind: input, shape index: {}]
  %s14 = inlined_call_operand.vmem [shape: f32[1,128], index: 14, kind: input, shape index: {}]
  %s15 = inlined_call_operand.hbm [shape: bf16[128,128], index: 15, kind: input, shape index: {}]
  %s16 = inlined_call_operand.vmem [shape: f32[1,128], index: 16, kind: input, shape index: {}]
  %s17 = inlined_call_operand.hbm [shape: bf16[128,128], index: 17, kind: input, shape index: {}]
  %s18 = inlined_call_operand.vmem [shape: f32[1,128], index: 18, kind: input, shape index: {}]
  %s19 = inlined_call_operand.vmem [shape: f32[8,640], index: 19, kind: output, shape index: {}]
  %s20 = sld [smem:[#allocation0]]
  $region130: #{enhanced_autoencoder_forward.1} parent=0
    _
  %s22 = ssub.s32 1, %s20
  %s23 = scalar_select 0, %s22, %s20
  $region1: #{enhanced_autoencoder_forward.1} parent=0
    #allocation2 [shape = 'u8[4096]{0}', space=vmem, size = 0x1000, scoped, tag = 'input window, operand 0, single buffered']
    #allocation3 [shape = 's32[1]{0}', space=sflag, size = 0x4, scoped, tag = 'scoped memory for enhanced_autoencoder_forward.1']
    #allocation4 [shape = 'u8[32768]{0}', space=vmem, size = 0x8000, scoped, tag = 'input window, operand 5, single buffered']
    #allocation5 [shape = 's32[1]{0}', space=sflag, size = 0x4, scoped, tag = 'scoped memory for enhanced_autoencoder_forward.1']
    #allocation6 [shape = 'u8[32768]{0}', space=vmem, size = 0x8000, scoped, tag = 'input window, operand 7, single buffered']
    #allocation7 [shape = 'u8[512]{0}', space=vmem, size = 0x400, scoped, tag = 'input window, operand 8, single buffered']
    #allocation8 [shape = 's32[1]{0}', space=sflag, size = 0x4, scoped, tag = 'scoped memory for enhanced_autoencoder_forward.1']
    #allocation9 [shape = 'u8[32768]{0}', space=vmem, size = 0x8000, scoped, tag = 'input window, operand 9, single buffered']
    #allocation10 [shape = 'u8[512]{0}', space=vmem, size = 0x400, scoped, tag = 'input window, operand 10, single buffered']
    #allocation11 [shape = 's32[1]{0}', space=sflag, size = 0x4, scoped, tag = 'scoped memory for enhanced_autoencoder_forward.1']
    #allocation12 [shape = 'u8[32768]{0}', space=vmem, size = 0x8000, scoped, tag = 'input window, operand 11, single buffered']
    #allocation13 [shape = 'u8[512]{0}', space=vmem, size = 0x400, scoped, tag = 'input window, operand 12, single buffered']
    #allocation14 [shape = 's32[1]{0}', space=sflag, size = 0x4, scoped, tag = 'scoped memory for enhanced_autoencoder_forward.1']
    #allocation15 [shape = 'u8[32768]{0}', space=vmem, size = 0x8000, scoped, tag = 'input window, operand 13, single buffered']
    #allocation16 [shape = 'u8[32768]{0}', space=vmem, size = 0x8000, scoped, tag = 'input window, operand 15, single buffered']
    #allocation17 [shape = 's32[1]{0}', space=sflag, size = 0x4, scoped, tag = 'scoped memory for enhanced_autoencoder_forward.1']
    #allocation18 [shape = 'u8[32768]{0}', space=vmem, size = 0x8000, scoped, tag = 'input window, operand 17, single buffered']
    %24 = vsyncpa [#allocation3], 0
    %25 = vsyncpa [#allocation5], 0
    %26 = vsyncpa [#allocation8], 0
    %27 = vsyncpa [#allocation11], 0
    %28 = vsyncpa [#allocation14], 0
    %29 = vsyncpa [#allocation17], 0
    // Predicated region
    $region2: #{enhanced_autoencoder_forward.1} parent=1 // pred_check
      _
    $region3: #{enhanced_autoencoder_forward.1} parent=1 // pred_check_branch
      %31 = sbr.rel (0) target = $region5
    $region4: #{enhanced_autoencoder_forward.1} parent=1 // pred_region
      %s33 = ssub.s32 128, 128
      %34 = vsyncadd [#allocation3], %s33
      %s36 = sshll.u32 [#allocation2], 4
      %s37 = int_to_ptr.vmem [resolvable:$true] %s36
      %39 = dma.hbm_to_vmem [thread:$0]  %s0, 128, %s37, [#allocation3]
    $region5: #{enhanced_autoencoder_forward.1} parent=1 // pred_fallthru
      _
    // Predicated region
    $region6: #{enhanced_autoencoder_forward.1} parent=1 // pred_check
      _
    $region7: #{enhanced_autoencoder_forward.1} parent=1 // pred_check_branch
      %41 = sbr.rel (0) target = $region9
    $region8: #{enhanced_autoencoder_forward.1} parent=1 // pred_region
      _
    $region9: #{enhanced_autoencoder_forward.1} parent=1 // pred_fallthru
      _
    // Predicated region
    $region10: #{enhanced_autoencoder_forward.1} parent=1 // pred_check
      _
    $region11: #{enhanced_autoencoder_forward.1} parent=1 // pred_check_branch
      %43 = sbr.rel (0) target = $region13
    $region12: #{enhanced_autoencoder_forward.1} parent=1 // pred_region
      _
    $region13: #{enhanced_autoencoder_forward.1} parent=1 // pred_fallthru
      _
    // Predicated region
    $region14: #{enhanced_autoencoder_forward.1} parent=1 // pred_check
      _
    $region15: #{enhanced_autoencoder_forward.1} parent=1 // pred_check_branch
      %45 = sbr.rel (0) target = $region17
    $region16: #{enhanced_autoencoder_forward.1} parent=1 // pred_region
      _
    $region17: #{enhanced_autoencoder_forward.1} parent=1 // pred_fallthru
      _
    // Predicated region
    $region18: #{enhanced_autoencoder_forward.1} parent=1 // pred_check
      _
    $region19: #{enhanced_autoencoder_forward.1} parent=1 // pred_check_branch
      %47 = sbr.rel (0) target = $region21
    $region20: #{enhanced_autoencoder_forward.1} parent=1 // pred_region
      _
    $region21: #{enhanced_autoencoder_forward.1} parent=1 // pred_fallthru
      _
    // Predicated region
    $region22: #{enhanced_autoencoder_forward.1} parent=1 // pred_check
      _
    $region23: #{enhanced_autoencoder_forward.1} parent=1 // pred_check_branch
      %49 = sbr.rel (0) target = $region25
    $region24: #{enhanced_autoencoder_forward.1} parent=1 // pred_region
      %s51 = ssub.s32 1024, 1024
      %52 = vsyncadd [#allocation5], %s51
      %s53 = sshll.u32 [#allocation4], 4
      %s54 = int_to_ptr.vmem [resolvable:$true] %s53
      %59 = dma.hbm_to_vmem [thread:$0]  %s5, 1024, %s54, [#allocation5], 64, 64, 4
    $region25: #{enhanced_autoencoder_forward.1} parent=1 // pred_fallthru
      _
    // Predicated region
    $region26: #{enhanced_autoencoder_forward.1} parent=1 // pred_check
      _
    $region27: #{enhanced_autoencoder_forward.1} parent=1 // pred_check_branch
      %61 = sbr.rel (0) target = $region29
    $region28: #{enhanced_autoencoder_forward.1} parent=1 // pred_region
      _
    $region29: #{enhanced_autoencoder_forward.1} parent=1 // pred_fallthru
      _
    // Predicated region
    $region30: #{enhanced_autoencoder_forward.1} parent=1 // pred_check
      _
    $region31: #{enhanced_autoencoder_forward.1} parent=1 // pred_check_branch
      %63 = sbr.rel (0) target = $region33
    $region32: #{enhanced_autoencoder_forward.1} parent=1 // pred_region
      %s65 = ssub.s32 1024, 1024
      %66 = vsyncadd [#allocation5], %s65
      %s67 = sshll.u32 [#allocation6], 4
      %s68 = int_to_ptr.vmem [resolvable:$true] %s67
      %73 = dma.hbm_to_vmem [thread:$0]  %s7, 1024, %s68, [#allocation5], 64, 64, 4
    $region33: #{enhanced_autoencoder_forward.1} parent=1 // pred_fallthru
      _
    // Predicated region
    $region34: #{enhanced_autoencoder_forward.1} parent=1 // pred_check
      _
    $region35: #{enhanced_autoencoder_forward.1} parent=1 // pred_check_branch
      %75 = sbr.rel (0) target = $region37
    $region36: #{enhanced_autoencoder_forward.1} parent=1 // pred_region
      %s77 = ssub.s32 16, 16
      %78 = vsyncadd [#allocation8], %s77
      %s80 = sshll.u32 [#allocation7], 4
      %s81 = int_to_ptr.vmem [resolvable:$true] %s80
      %83 = dma.hbm_to_vmem [thread:$0]  %s8, 16, %s81, [#allocation8]
    $region37: #{enhanced_autoencoder_forward.1} parent=1 // pred_fallthru
      _
    // Predicated region
    $region38: #{enhanced_autoencoder_forward.1} parent=1 // pred_check
      _
    $region39: #{enhanced_autoencoder_forward.1} parent=1 // pred_check_branch
      %85 = sbr.rel (0) target = $region41
    $region40: #{enhanced_autoencoder_forward.1} parent=1 // pred_region
      %s87 = ssub.s32 1024, 1024
      %88 = vsyncadd [#allocation8], %s87
      %s89 = sshll.u32 [#allocation9], 4
      %s90 = int_to_ptr.vmem [resolvable:$true] %s89
      %95 = dma.hbm_to_vmem [thread:$0]  %s9, 1024, %s90, [#allocation8], 64, 64, 4
    $region41: #{enhanced_autoencoder_forward.1} parent=1 // pred_fallthru
      _
    // Predicated region
    $region42: #{enhanced_autoencoder_forward.1} parent=1 // pred_check
      _
    $region43: #{enhanced_autoencoder_forward.1} parent=1 // pred_check_branch
      %97 = sbr.rel (0) target = $region45
    $region44: #{enhanced_autoencoder_forward.1} parent=1 // pred_region
      %s99 = ssub.s32 16, 16
      %100 = vsyncadd [#allocation11], %s99
      %s102 = sshll.u32 [#allocation10], 4
      %s103 = int_to_ptr.vmem [resolvable:$true] %s102
      %105 = dma.hbm_to_vmem [thread:$0]  %s10, 16, %s103, [#allocation11]
    $region45: #{enhanced_autoencoder_forward.1} parent=1 // pred_fallthru
      _
    // Predicated region
    $region46: #{enhanced_autoencoder_forward.1} parent=1 // pred_check
      _
    $region47: #{enhanced_autoencoder_forward.1} parent=1 // pred_check_branch
      %107 = sbr.rel (0) target = $region49
    $region48: #{enhanced_autoencoder_forward.1} parent=1 // pred_region
      %s109 = ssub.s32 1024, 1024
      %110 = vsyncadd [#allocation11], %s109
      %s111 = sshll.u32 [#allocation12], 4
      %s112 = int_to_ptr.vmem [resolvable:$true] %s111
      %117 = dma.hbm_to_vmem [thread:$0]  %s11, 1024, %s112, [#allocation11], 64, 64, 4
    $region49: #{enhanced_autoencoder_forward.1} parent=1 // pred_fallthru
      _
    // Predicated region
    $region50: #{enhanced_autoencoder_forward.1} parent=1 // pred_check
      _
    $region51: #{enhanced_autoencoder_forward.1} parent=1 // pred_check_branch
      %119 = sbr.rel (0) target = $region53
    $region52: #{enhanced_autoencoder_forward.1} parent=1 // pred_region
      %s121 = ssub.s32 16, 16
      %122 = vsyncadd [#allocation14], %s121
      %s124 = sshll.u32 [#allocation13], 4
      %s125 = int_to_ptr.vmem [resolvable:$true] %s124
      %127 = dma.hbm_to_vmem [thread:$0]  %s12, 16, %s125, [#allocation14]
    $region53: #{enhanced_autoencoder_forward.1} parent=1 // pred_fallthru
      _
    // Predicated region
    $region54: #{enhanced_autoencoder_forward.1} parent=1 // pred_check
      _
    $region55: #{enhanced_autoencoder_forward.1} parent=1 // pred_check_branch
      %129 = sbr.rel (0) target = $region57
    $region56: #{enhanced_autoencoder_forward.1} parent=1 // pred_region
      %s131 = ssub.s32 1024, 1024
      %132 = vsyncadd [#allocation14], %s131
      %s133 = sshll.u32 [#allocation15], 4
      %s134 = int_to_ptr.vmem [resolvable:$true] %s133
      %139 = dma.hbm_to_vmem [thread:$0]  %s13, 1024, %s134, [#allocation14], 64, 64, 4
    $region57: #{enhanced_autoencoder_forward.1} parent=1 // pred_fallthru
      _
    // Predicated region
    $region58: #{enhanced_autoencoder_forward.1} parent=1 // pred_check
      _
    $region59: #{enhanced_autoencoder_forward.1} parent=1 // pred_check_branch
      %141 = sbr.rel (0) target = $region61
    $region60: #{enhanced_autoencoder_forward.1} parent=1 // pred_region
      _
    $region61: #{enhanced_autoencoder_forward.1} parent=1 // pred_fallthru
      _
    // Predicated region
    $region62: #{enhanced_autoencoder_forward.1} parent=1 // pred_check
      _
    $region63: #{enhanced_autoencoder_forward.1} parent=1 // pred_check_branch
      %143 = sbr.rel (0) target = $region65
    $region64: #{enhanced_autoencoder_forward.1} parent=1 // pred_region
      %s145 = ssub.s32 1024, 1024
      %146 = vsyncadd [#allocation17], %s145
      %s147 = sshll.u32 [#allocation16], 4
      %s148 = int_to_ptr.vmem [resolvable:$true] %s147
      %153 = dma.hbm_to_vmem [thread:$0]  %s15, 1024, %s148, [#allocation17], 64, 64, 4
    $region65: #{enhanced_autoencoder_forward.1} parent=1 // pred_fallthru
      _
    // Predicated region
    $region66: #{enhanced_autoencoder_forward.1} parent=1 // pred_check
      _
    $region67: #{enhanced_autoencoder_forward.1} parent=1 // pred_check_branch
      %155 = sbr.rel (0) target = $region69
    $region68: #{enhanced_autoencoder_forward.1} parent=1 // pred_region
      _
    $region69: #{enhanced_autoencoder_forward.1} parent=1 // pred_fallthru
      _
    // Predicated region
    $region70: #{enhanced_autoencoder_forward.1} parent=1 // pred_check
      _
    $region71: #{enhanced_autoencoder_forward.1} parent=1 // pred_check_branch
      %157 = sbr.rel (0) target = $region73
    $region72: #{enhanced_autoencoder_forward.1} parent=1 // pred_region
      %s159 = ssub.s32 1024, 1024
      %160 = vsyncadd [#allocation17], %s159
      %s161 = sshll.u32 [#allocation18], 4
      %s162 = int_to_ptr.vmem [resolvable:$true] %s161
      %167 = dma.hbm_to_vmem [thread:$0]  %s17, 1024, %s162, [#allocation17], 64, 64, 4
    $region73: #{enhanced_autoencoder_forward.1} parent=1 // pred_fallthru
      _
    // Predicated region
    $region74: #{enhanced_autoencoder_forward.1} parent=1 // pred_check
      _
    $region75: #{enhanced_autoencoder_forward.1} parent=1 // pred_check_branch
      %169 = sbr.rel (0) target = $region77
    $region76: #{enhanced_autoencoder_forward.1} parent=1 // pred_region
      _
    $region77: #{enhanced_autoencoder_forward.1} parent=1 // pred_fallthru
      _
    // Predicated region
    $region78: #{enhanced_autoencoder_forward.1} parent=1 // pred_check
      _
    $region79: #{enhanced_autoencoder_forward.1} parent=1 // pred_check_branch
      %171 = sbr.rel (0) target = $region81
    $region80: #{enhanced_autoencoder_forward.1} parent=1 // pred_region
      %172 = dma.done [#allocation3], 128
    $region81: #{enhanced_autoencoder_forward.1} parent=1 // pred_fallthru
      _
    // Predicated region
    $region82: #{enhanced_autoencoder_forward.1} parent=1 // pred_check
      _
    $region83: #{enhanced_autoencoder_forward.1} parent=1 // pred_check_branch
      %174 = sbr.rel (0) target = $region85
    $region84: #{enhanced_autoencoder_forward.1} parent=1 // pred_region
      %175 = dma.done [#allocation5], 1024
    $region85: #{enhanced_autoencoder_forward.1} parent=1 // pred_fallthru
      _
    // Predicated region
    $region86: #{enhanced_autoencoder_forward.1} parent=1 // pred_check
      _
    $region87: #{enhanced_autoencoder_forward.1} parent=1 // pred_check_branch
      %177 = sbr.rel (0) target = $region89
    $region88: #{enhanced_autoencoder_forward.1} parent=1 // pred_region
      %178 = dma.done [#allocation5], 1024
    $region89: #{enhanced_autoencoder_forward.1} parent=1 // pred_fallthru
      _
    // Predicated region
    $region90: #{enhanced_autoencoder_forward.1} parent=1 // pred_check
      _
    $region91: #{enhanced_autoencoder_forward.1} parent=1 // pred_check_branch
      %180 = sbr.rel (0) target = $region93
    $region92: #{enhanced_autoencoder_forward.1} parent=1 // pred_region
      %181 = dma.done [#allocation8], 16
    $region93: #{enhanced_autoencoder_forward.1} parent=1 // pred_fallthru
      _
    // Predicated region
    $region94: #{enhanced_autoencoder_forward.1} parent=1 // pred_check
      _
    $region95: #{enhanced_autoencoder_forward.1} parent=1 // pred_check_branch
      %183 = sbr.rel (0) target = $region97
    $region96: #{enhanced_autoencoder_forward.1} parent=1 // pred_region
      %184 = dma.done [#allocation8], 1024
    $region97: #{enhanced_autoencoder_forward.1} parent=1 // pred_fallthru
      _
    // Predicated region
    $region98: #{enhanced_autoencoder_forward.1} parent=1 // pred_check
      _
    $region99: #{enhanced_autoencoder_forward.1} parent=1 // pred_check_branch
      %186 = sbr.rel (0) target = $region101
    $region100: #{enhanced_autoencoder_forward.1} parent=1 // pred_region
      %187 = dma.done [#allocation11], 16
    $region101: #{enhanced_autoencoder_forward.1} parent=1 // pred_fallthru
      _
    // Predicated region
    $region102: #{enhanced_autoencoder_forward.1} parent=1 // pred_check
      _
    $region103: #{enhanced_autoencoder_forward.1} parent=1 // pred_check_branch
      %189 = sbr.rel (0) target = $region105
    $region104: #{enhanced_autoencoder_forward.1} parent=1 // pred_region
      %190 = dma.done [#allocation11], 1024
    $region105: #{enhanced_autoencoder_forward.1} parent=1 // pred_fallthru
      _
    // Predicated region
    $region106: #{enhanced_autoencoder_forward.1} parent=1 // pred_check
      _
    $region107: #{enhanced_autoencoder_forward.1} parent=1 // pred_check_branch
      %192 = sbr.rel (0) target = $region109
    $region108: #{enhanced_autoencoder_forward.1} parent=1 // pred_region
      %193 = dma.done [#allocation14], 16
    $region109: #{enhanced_autoencoder_forward.1} parent=1 // pred_fallthru
      _
    // Predicated region
    $region110: #{enhanced_autoencoder_forward.1} parent=1 // pred_check
      _
    $region111: #{enhanced_autoencoder_forward.1} parent=1 // pred_check_branch
      %195 = sbr.rel (0) target = $region113
    $region112: #{enhanced_autoencoder_forward.1} parent=1 // pred_region
      %196 = dma.done [#allocation14], 1024
    $region113: #{enhanced_autoencoder_forward.1} parent=1 // pred_fallthru
      _
    // Predicated region
    $region114: #{enhanced_autoencoder_forward.1} parent=1 // pred_check
      _
    $region115: #{enhanced_autoencoder_forward.1} parent=1 // pred_check_branch
      %198 = sbr.rel (0) target = $region117
    $region116: #{enhanced_autoencoder_forward.1} parent=1 // pred_region
      %199 = dma.done [#allocation17], 1024
    $region117: #{enhanced_autoencoder_forward.1} parent=1 // pred_fallthru
      _
    // Predicated region
    $region118: #{enhanced_autoencoder_forward.1} parent=1 // pred_check
      _
    $region119: #{enhanced_autoencoder_forward.1} parent=1 // pred_check_branch
      %201 = sbr.rel (0) target = $region121
    $region120: #{enhanced_autoencoder_forward.1} parent=1 // pred_region
      %202 = dma.done [#allocation17], 1024
    $region121: #{enhanced_autoencoder_forward.1} parent=1 // pred_fallthru
      _
    %v204 = vld [vmem:[#allocation2] sm:$0xff]
    %v205 = vld [vmem:[%s1] sm:$0xff]
    %v206 = vadd.f32 %v204, %v205
    %v207 = vld [vmem:[%s2] sm:$0xff]
    %v208 = vadd.f32 %v204, %v207
    %v209 = vpack.c.bf16 %v208, %v206
    %v210 = vpack.c.bf16 %v204, %v204
    %v211 = vld [vmem:[%s3] sm:$0xf]
    %v212 = vld [vmem:[%s3 + $0x4] sm:$0xf]
    %v213 = vld [vmem:[%s3 + $0x8] sm:$0xf]
    %v214 = vld [vmem:[%s3 + $0xc] sm:$0xf]
    %v215 = vld [vmem:[%s4] sm:$0x1]
    %v217 = vlaneseq
    %v218 = vshrl.u32 %v217, 7
    %v219 = vsub.s32 0, %v218
    %v220 = vrot.slane %v215, %v219
    %v226 = vunpack.c.l.b16 %v211
    %v227 = vunpack.c.l.b16 %v212
    %v228 = vunpack.c.l.b16 %v213
    %v229 = vunpack.c.l.b16 %v214
    %v230 = vpack.c.b16 %v227, %v226
    %v231 = vpack.c.b16 %v229, %v228
    %vm234 = vcmask 261120
    %v236 = vsel %vm234, %v209, 0
    %v239 = vsel %vm234, %v210, 0
    %241 = vmatprep.subr.bf16.mxu0 0
    %242 = vmatpush1.bf16.msra.mxu0 %v230
    %243 = vmatprep.subr.bf16.mxu0 0
    %244 = vmatpush1.bf16.msra.mxu0 %v231
    %245 = vmatprep.subr.bf16.mxu0 0
    %246 = vmatpush1.bf16.msra.mxu0 0
    %247 = vmatprep.subr.bf16.mxu0 0
    %248 = vmatpush1.bf16.msra.mxu0 0
    %249 = vmatprep.subr.bf16.mxu0 0
    %250 = vmatpush1.bf16.msra.mxu0 0
    %251 = vmatprep.subr.bf16.mxu0 0
    %252 = vmatpush1.bf16.msra.mxu0 0
    %253 = vmatprep.subr.bf16.mxu0 0
    %254 = vmatpush1.bf16.msra.mxu0 0
    %255 = vmatprep.subr.bf16.mxu0 0
    %256 = vmatpush1.bf16.msra.mxu0 0
    %257 = vmatprep.subr.bf16.mxu0 0
    %258 = vmatpush1.bf16.msra.mxu0 0
    %259 = vmatprep.subr.bf16.mxu0 0
    %260 = vmatpush1.bf16.msra.mxu0 0
    %261 = vmatprep.subr.bf16.mxu0 0
    %262 = vmatpush1.bf16.msra.mxu0 0
    %263 = vmatprep.subr.bf16.mxu0 0
    %264 = vmatpush1.bf16.msra.mxu0 0
    %265 = vmatprep.subr.bf16.mxu0 0
    %266 = vmatpush1.bf16.msra.mxu0 0
    %267 = vmatprep.subr.bf16.mxu0 0
    %268 = vmatpush1.bf16.msra.mxu0 0
    %269 = vmatprep.subr.bf16.mxu0 0
    %270 = vmatpush1.bf16.msra.mxu0 0
    %271 = vmatprep.subr.bf16.mxu0 0
    %272 = vmatpush1.bf16.msra.mxu0 0
    %273 = vmatprep.mubr.bf16.mxu0 0
    %274 = vmatmul.mubr.bf16.gmra.mrb[0].mxu0 %v236
    %v275 = vpop.f32.mrb[0].mxu0
    %v276 = vadd.f32 %v220, %v275
    %v277 = vpop.f32.mrb[0].mxu0
    %v278 = vpop.f32.mrb[0].mxu0
    %v279 = vadd.f32 %v220, %v278
    %v280 = vpop.f32.mrb[0].mxu0
    %281 = vmatprep.mubr.bf16.mxu0 0
    %282 = vmatmul.mubr.bf16.gmra.mrb[0].mxu0 %v239
    %v283 = vpop.f32.mrb[0].mxu0
    %v284 = vadd.f32 %v220, %v283
    %v285 = vpop.f32.mrb[0].mxu0
    %v286 = vpop.f32.mrb[0].mxu0
    %v287 = vpop.f32.mrb[0].mxu0
    %288 = vdwg.mxu0
    %v289 = vmax.f32 %v276, 0.0
    %v290 = vmax.f32 %v279, 0.0
    %v291 = vmax.f32 %v284, 0.0
    %v292 = vpack.c.bf16 %v290, %v289
    %v293 = vpack.c.bf16 %v291, %v291
    %v294 = vld [vmem:[#allocation4] sm:$0xf]
    %v295 = vld [vmem:[#allocation4 + $0x4] sm:$0xf]
    %v296 = vld [vmem:[#allocation4 + $0x8] sm:$0xf]
    %v297 = vld [vmem:[#allocation4 + $0xc] sm:$0xf]
    %v298 = vld [vmem:[#allocation4 + $0x10] sm:$0xf]
    %v299 = vld [vmem:[#allocation4 + $0x14] sm:$0xf]
    %v300 = vld [vmem:[#allocation4 + $0x18] sm:$0xf]
    %v301 = vld [vmem:[#allocation4 + $0x1c] sm:$0xf]
    %v302 = vld [vmem:[#allocation4 + $0x20] sm:$0xf]
    %v303 = vld [vmem:[#allocation4 + $0x24] sm:$0xf]
    %v304 = vld [vmem:[#allocation4 + $0x28] sm:$0xf]
    %v305 = vld [vmem:[#allocation4 + $0x2c] sm:$0xf]
    %v306 = vld [vmem:[#allocation4 + $0x30] sm:$0xf]
    %v307 = vld [vmem:[#allocation4 + $0x34] sm:$0xf]
    %v308 = vld [vmem:[#allocation4 + $0x38] sm:$0xf]
    %v309 = vld [vmem:[#allocation4 + $0x3c] sm:$0xf]
    %v310 = vld [vmem:[%s6] sm:$0x1]
    %v312 = vlaneseq
    %v313 = vshrl.u32 %v312, 7
    %v314 = vsub.s32 0, %v313
    %v315 = vrot.slane %v310, %v314
    %v333 = vunpack.c.l.b16 %v294
    %v334 = vunpack.c.l.b16 %v295
    %v335 = vunpack.c.l.b16 %v296
    %v336 = vunpack.c.l.b16 %v297
    %v337 = vunpack.c.l.b16 %v298
    %v338 = vunpack.c.l.b16 %v299
    %v339 = vunpack.c.l.b16 %v300
    %v340 = vunpack.c.l.b16 %v301
    %v341 = vunpack.c.l.b16 %v302
    %v342 = vunpack.c.l.b16 %v303
    %v343 = vunpack.c.l.b16 %v304
    %v344 = vunpack.c.l.b16 %v305
    %v345 = vunpack.c.l.b16 %v306
    %v346 = vunpack.c.l.b16 %v307
    %v347 = vunpack.c.l.b16 %v308
    %v348 = vunpack.c.l.b16 %v309
    %v349 = vpack.c.b16 %v334, %v333
    %v350 = vpack.c.b16 %v336, %v335
    %v351 = vpack.c.b16 %v338, %v337
    %v352 = vpack.c.b16 %v340, %v339
    %v353 = vpack.c.b16 %v342, %v341
    %v354 = vpack.c.b16 %v344, %v343
    %v355 = vpack.c.b16 %v346, %v345
    %v356 = vpack.c.b16 %v348, %v347
    %365 = vmatprep.subr.bf16.mxu0 0
    %366 = vmatpush1.bf16.msra.mxu0 %v349
    %367 = vmatprep.subr.bf16.mxu0 0
    %368 = vmatpush1.bf16.msra.mxu0 %v350
    %369 = vmatprep.subr.bf16.mxu0 0
    %370 = vmatpush1.bf16.msra.mxu0 %v351
    %371 = vmatprep.subr.bf16.mxu0 0
    %372 = vmatpush1.bf16.msra.mxu0 %v352
    %373 = vmatprep.subr.bf16.mxu0 0
    %374 = vmatpush1.bf16.msra.mxu0 %v353
    %375 = vmatprep.subr.bf16.mxu0 0
    %376 = vmatpush1.bf16.msra.mxu0 %v354
    %377 = vmatprep.subr.bf16.mxu0 0
    %378 = vmatpush1.bf16.msra.mxu0 %v355
    %379 = vmatprep.subr.bf16.mxu0 0
    %380 = vmatpush1.bf16.msra.mxu0 %v356
    %381 = vmatprep.subr.bf16.mxu0 0
    %382 = vmatpush1.bf16.msra.mxu0 0
    %383 = vmatprep.subr.bf16.mxu0 0
    %384 = vmatpush1.bf16.msra.mxu0 0
    %385 = vmatprep.subr.bf16.mxu0 0
    %386 = vmatpush1.bf16.msra.mxu0 0
    %387 = vmatprep.subr.bf16.mxu0 0
    %388 = vmatpush1.bf16.msra.mxu0 0
    %389 = vmatprep.subr.bf16.mxu0 0
    %390 = vmatpush1.bf16.msra.mxu0 0
    %391 = vmatprep.subr.bf16.mxu0 0
    %392 = vmatpush1.bf16.msra.mxu0 0
    %393 = vmatprep.subr.bf16.mxu0 0
    %394 = vmatpush1.bf16.msra.mxu0 0
    %395 = vmatprep.subr.bf16.mxu0 0
    %396 = vmatpush1.bf16.msra.mxu0 0
    %397 = vmatprep.mubr.bf16.mxu0 0
    %398 = vmatmul.mubr.bf16.gmra.mrb[0].mxu0 %v292
    %v399 = vpop.f32.mrb[0].mxu0
    %v400 = vadd.f32 %v315, %v399
    %v401 = vpop.f32.mrb[0].mxu0
    %v402 = vpop.f32.mrb[0].mxu0
    %v403 = vadd.f32 %v315, %v402
    %v404 = vpop.f32.mrb[0].mxu0
    %405 = vmatprep.mubr.bf16.mxu0 0
    %406 = vmatmul.mubr.bf16.gmra.mrb[0].mxu0 %v293
    %v407 = vpop.f32.mrb[0].mxu0
    %v408 = vadd.f32 %v315, %v407
    %v409 = vpop.f32.mrb[0].mxu0
    %v410 = vpop.f32.mrb[0].mxu0
    %v411 = vpop.f32.mrb[0].mxu0
    %412 = vdwg.mxu0
    %v413 = vmax.f32 %v400, 0.0
    %v414 = vmax.f32 %v403, 0.0
    %v415 = vmax.f32 %v408, 0.0
    %v416 = vpack.c.bf16 %v414, %v413
    %v417 = vpack.c.bf16 %v415, %v415
    %v418 = vld [vmem:[#allocation6] sm:$0xf]
    %v419 = vld [vmem:[#allocation6 + $0x4] sm:$0xf]
    %v420 = vld [vmem:[#allocation6 + $0x8] sm:$0xf]
    %v421 = vld [vmem:[#allocation6 + $0xc] sm:$0xf]
    %v422 = vld [vmem:[#allocation6 + $0x10] sm:$0xf]
    %v423 = vld [vmem:[#allocation6 + $0x14] sm:$0xf]
    %v424 = vld [vmem:[#allocation6 + $0x18] sm:$0xf]
    %v425 = vld [vmem:[#allocation6 + $0x1c] sm:$0xf]
    %v426 = vld [vmem:[#allocation6 + $0x20] sm:$0xf]
    %v427 = vld [vmem:[#allocation6 + $0x24] sm:$0xf]
    %v428 = vld [vmem:[#allocation6 + $0x28] sm:$0xf]
    %v429 = vld [vmem:[#allocation6 + $0x2c] sm:$0xf]
    %v430 = vld [vmem:[#allocation6 + $0x30] sm:$0xf]
    %v431 = vld [vmem:[#allocation6 + $0x34] sm:$0xf]
    %v432 = vld [vmem:[#allocation6 + $0x38] sm:$0xf]
    %v433 = vld [vmem:[#allocation6 + $0x3c] sm:$0xf]
    %v434 = vld [vmem:[#allocation7] sm:$0x1]
    %v436 = vlaneseq
    %v437 = vshrl.u32 %v436, 7
    %v438 = vsub.s32 0, %v437
    %v439 = vrot.slane %v434, %v438
    %v457 = vunpack.c.l.b16 %v418
    %v458 = vunpack.c.l.b16 %v419
    %v459 = vunpack.c.l.b16 %v420
    %v460 = vunpack.c.l.b16 %v421
    %v461 = vunpack.c.l.b16 %v422
    %v462 = vunpack.c.l.b16 %v423
    %v463 = vunpack.c.l.b16 %v424
    %v464 = vunpack.c.l.b16 %v425
    %v465 = vunpack.c.l.b16 %v426
    %v466 = vunpack.c.l.b16 %v427
    %v467 = vunpack.c.l.b16 %v428
    %v468 = vunpack.c.l.b16 %v429
    %v469 = vunpack.c.l.b16 %v430
    %v470 = vunpack.c.l.b16 %v431
    %v471 = vunpack.c.l.b16 %v432
    %v472 = vunpack.c.l.b16 %v433
    %v473 = vpack.c.b16 %v458, %v457
    %v474 = vpack.c.b16 %v460, %v459
    %v475 = vpack.c.b16 %v462, %v461
    %v476 = vpack.c.b16 %v464, %v463
    %v477 = vpack.c.b16 %v466, %v465
    %v478 = vpack.c.b16 %v468, %v467
    %v479 = vpack.c.b16 %v470, %v469
    %v480 = vpack.c.b16 %v472, %v471
    %489 = vmatprep.subr.bf16.mxu0 0
    %490 = vmatpush1.bf16.msra.mxu0 %v473
    %491 = vmatprep.subr.bf16.mxu0 0
    %492 = vmatpush1.bf16.msra.mxu0 %v474
    %493 = vmatprep.subr.bf16.mxu0 0
    %494 = vmatpush1.bf16.msra.mxu0 %v475
    %495 = vmatprep.subr.bf16.mxu0 0
    %496 = vmatpush1.bf16.msra.mxu0 %v476
    %497 = vmatprep.subr.bf16.mxu0 0
    %498 = vmatpush1.bf16.msra.mxu0 %v477
    %499 = vmatprep.subr.bf16.mxu0 0
    %500 = vmatpush1.bf16.msra.mxu0 %v478
    %501 = vmatprep.subr.bf16.mxu0 0
    %502 = vmatpush1.bf16.msra.mxu0 %v479
    %503 = vmatprep.subr.bf16.mxu0 0
    %504 = vmatpush1.bf16.msra.mxu0 %v480
    %505 = vmatprep.subr.bf16.mxu0 0
    %506 = vmatpush1.bf16.msra.mxu0 0
    %507 = vmatprep.subr.bf16.mxu0 0
    %508 = vmatpush1.bf16.msra.mxu0 0
    %509 = vmatprep.subr.bf16.mxu0 0
    %510 = vmatpush1.bf16.msra.mxu0 0
    %511 = vmatprep.subr.bf16.mxu0 0
    %512 = vmatpush1.bf16.msra.mxu0 0
    %513 = vmatprep.subr.bf16.mxu0 0
    %514 = vmatpush1.bf16.msra.mxu0 0
    %515 = vmatprep.subr.bf16.mxu0 0
    %516 = vmatpush1.bf16.msra.mxu0 0
    %517 = vmatprep.subr.bf16.mxu0 0
    %518 = vmatpush1.bf16.msra.mxu0 0
    %519 = vmatprep.subr.bf16.mxu0 0
    %520 = vmatpush1.bf16.msra.mxu0 0
    %521 = vmatprep.mubr.bf16.mxu0 0
    %522 = vmatmul.mubr.bf16.gmra.mrb[0].mxu0 %v416
    %v523 = vpop.f32.mrb[0].mxu0
    %v524 = vadd.f32 %v439, %v523
    %v525 = vpop.f32.mrb[0].mxu0
    %v526 = vpop.f32.mrb[0].mxu0
    %v527 = vadd.f32 %v439, %v526
    %v528 = vpop.f32.mrb[0].mxu0
    %529 = vmatprep.mubr.bf16.mxu0 0
    %530 = vmatmul.mubr.bf16.gmra.mrb[0].mxu0 %v417
    %v531 = vpop.f32.mrb[0].mxu0
    %v532 = vadd.f32 %v439, %v531
    %v533 = vpop.f32.mrb[0].mxu0
    %v534 = vpop.f32.mrb[0].mxu0
    %v535 = vpop.f32.mrb[0].mxu0
    %536 = vdwg.mxu0
    %v537 = vpack.c.bf16 %v527, %v524
    %v538 = vld [vmem:[#allocation9] sm:$0xf]
    %v539 = vld [vmem:[#allocation9 + $0x4] sm:$0xf]
    %v540 = vld [vmem:[#allocation9 + $0x8] sm:$0xf]
    %v541 = vld [vmem:[#allocation9 + $0xc] sm:$0xf]
    %v542 = vld [vmem:[#allocation9 + $0x10] sm:$0xf]
    %v543 = vld [vmem:[#allocation9 + $0x14] sm:$0xf]
    %v544 = vld [vmem:[#allocation9 + $0x18] sm:$0xf]
    %v545 = vld [vmem:[#allocation9 + $0x1c] sm:$0xf]
    %v546 = vld [vmem:[#allocation9 + $0x20] sm:$0xf]
    %v547 = vld [vmem:[#allocation9 + $0x24] sm:$0xf]
    %v548 = vld [vmem:[#allocation9 + $0x28] sm:$0xf]
    %v549 = vld [vmem:[#allocation9 + $0x2c] sm:$0xf]
    %v550 = vld [vmem:[#allocation9 + $0x30] sm:$0xf]
    %v551 = vld [vmem:[#allocation9 + $0x34] sm:$0xf]
    %v552 = vld [vmem:[#allocation9 + $0x38] sm:$0xf]
    %v553 = vld [vmem:[#allocation9 + $0x3c] sm:$0xf]
    %v554 = vld [vmem:[#allocation10] sm:$0x1]
    %v556 = vlaneseq
    %v557 = vshrl.u32 %v556, 7
    %v558 = vsub.s32 0, %v557
    %v559 = vrot.slane %v554, %v558
    %v577 = vunpack.c.l.b16 %v538
    %v578 = vunpack.c.l.b16 %v539
    %v579 = vunpack.c.l.b16 %v540
    %v580 = vunpack.c.l.b16 %v541
    %v581 = vunpack.c.l.b16 %v542
    %v582 = vunpack.c.l.b16 %v543
    %v583 = vunpack.c.l.b16 %v544
    %v584 = vunpack.c.l.b16 %v545
    %v585 = vunpack.c.l.b16 %v546
    %v586 = vunpack.c.l.b16 %v547
    %v587 = vunpack.c.l.b16 %v548
    %v588 = vunpack.c.l.b16 %v549
    %v589 = vunpack.c.l.b16 %v550
    %v590 = vunpack.c.l.b16 %v551
    %v591 = vunpack.c.l.b16 %v552
    %v592 = vunpack.c.l.b16 %v553
    %v593 = vpack.c.b16 %v578, %v577
    %v594 = vpack.c.b16 %v580, %v579
    %v595 = vpack.c.b16 %v582, %v581
    %v596 = vpack.c.b16 %v584, %v583
    %v597 = vpack.c.b16 %v586, %v585
    %v598 = vpack.c.b16 %v588, %v587
    %v599 = vpack.c.b16 %v590, %v589
    %v600 = vpack.c.b16 %v592, %v591
    %609 = vmatprep.subr.bf16.mxu0 0
    %610 = vmatpush1.bf16.msra.mxu0 %v593
    %611 = vmatprep.subr.bf16.mxu0 0
    %612 = vmatpush1.bf16.msra.mxu0 %v594
    %613 = vmatprep.subr.bf16.mxu0 0
    %614 = vmatpush1.bf16.msra.mxu0 %v595
    %615 = vmatprep.subr.bf16.mxu0 0
    %616 = vmatpush1.bf16.msra.mxu0 %v596
    %617 = vmatprep.subr.bf16.mxu0 0
    %618 = vmatpush1.bf16.msra.mxu0 %v597
    %619 = vmatprep.subr.bf16.mxu0 0
    %620 = vmatpush1.bf16.msra.mxu0 %v598
    %621 = vmatprep.subr.bf16.mxu0 0
    %622 = vmatpush1.bf16.msra.mxu0 %v599
    %623 = vmatprep.subr.bf16.mxu0 0
    %624 = vmatpush1.bf16.msra.mxu0 %v600
    %625 = vmatprep.subr.bf16.mxu0 0
    %626 = vmatpush1.bf16.msra.mxu0 0
    %627 = vmatprep.subr.bf16.mxu0 0
    %628 = vmatpush1.bf16.msra.mxu0 0
    %629 = vmatprep.subr.bf16.mxu0 0
    %630 = vmatpush1.bf16.msra.mxu0 0
    %631 = vmatprep.subr.bf16.mxu0 0
    %632 = vmatpush1.bf16.msra.mxu0 0
    %633 = vmatprep.subr.bf16.mxu0 0
    %634 = vmatpush1.bf16.msra.mxu0 0
    %635 = vmatprep.subr.bf16.mxu0 0
    %636 = vmatpush1.bf16.msra.mxu0 0
    %637 = vmatprep.subr.bf16.mxu0 0
    %638 = vmatpush1.bf16.msra.mxu0 0
    %639 = vmatprep.subr.bf16.mxu0 0
    %640 = vmatpush1.bf16.msra.mxu0 0
    %641 = vmatprep.mubr.bf16.mxu0 0
    %642 = vmatmul.mubr.bf16.gmra.mrb[0].mxu0 %v537
    %v643 = vpop.f32.mrb[0].mxu0
    %v644 = vadd.f32 %v559, %v643
    %v645 = vpop.f32.mrb[0].mxu0
    %v646 = vpop.f32.mrb[0].mxu0
    %v647 = vadd.f32 %v559, %v646
    %v648 = vpop.f32.mrb[0].mxu0
    %649 = vdwg.mxu0
    %v650 = vmax.f32 %v644, 0.0
    %v651 = vmax.f32 %v647, 0.0
    %v652 = vpack.c.bf16 %v651, %v650
    %v653 = vld [vmem:[#allocation12] sm:$0xf]
    %v654 = vld [vmem:[#allocation12 + $0x4] sm:$0xf]
    %v655 = vld [vmem:[#allocation12 + $0x8] sm:$0xf]
    %v656 = vld [vmem:[#allocation12 + $0xc] sm:$0xf]
    %v657 = vld [vmem:[#allocation12 + $0x10] sm:$0xf]
    %v658 = vld [vmem:[#allocation12 + $0x14] sm:$0xf]
    %v659 = vld [vmem:[#allocation12 + $0x18] sm:$0xf]
    %v660 = vld [vmem:[#allocation12 + $0x1c] sm:$0xf]
    %v661 = vld [vmem:[#allocation12 + $0x20] sm:$0xf]
    %v662 = vld [vmem:[#allocation12 + $0x24] sm:$0xf]
    %v663 = vld [vmem:[#allocation12 + $0x28] sm:$0xf]
    %v664 = vld [vmem:[#allocation12 + $0x2c] sm:$0xf]
    %v665 = vld [vmem:[#allocation12 + $0x30] sm:$0xf]
    %v666 = vld [vmem:[#allocation12 + $0x34] sm:$0xf]
    %v667 = vld [vmem:[#allocation12 + $0x38] sm:$0xf]
    %v668 = vld [vmem:[#allocation12 + $0x3c] sm:$0xf]
    %v669 = vld [vmem:[#allocation13] sm:$0x1]
    %v671 = vlaneseq
    %v672 = vshrl.u32 %v671, 7
    %v673 = vsub.s32 0, %v672
    %v674 = vrot.slane %v669, %v673
    %v692 = vunpack.c.l.b16 %v653
    %v693 = vunpack.c.l.b16 %v654
    %v694 = vunpack.c.l.b16 %v655
    %v695 = vunpack.c.l.b16 %v656
    %v696 = vunpack.c.l.b16 %v657
    %v697 = vunpack.c.l.b16 %v658
    %v698 = vunpack.c.l.b16 %v659
    %v699 = vunpack.c.l.b16 %v660
    %v700 = vunpack.c.l.b16 %v661
    %v701 = vunpack.c.l.b16 %v662
    %v702 = vunpack.c.l.b16 %v663
    %v703 = vunpack.c.l.b16 %v664
    %v704 = vunpack.c.l.b16 %v665
    %v705 = vunpack.c.l.b16 %v666
    %v706 = vunpack.c.l.b16 %v667
    %v707 = vunpack.c.l.b16 %v668
    %v708 = vpack.c.b16 %v693, %v692
    %v709 = vpack.c.b16 %v695, %v694
    %v710 = vpack.c.b16 %v697, %v696
    %v711 = vpack.c.b16 %v699, %v698
    %v712 = vpack.c.b16 %v701, %v700
    %v713 = vpack.c.b16 %v703, %v702
    %v714 = vpack.c.b16 %v705, %v704
    %v715 = vpack.c.b16 %v707, %v706
    %724 = vmatprep.subr.bf16.mxu0 0
    %725 = vmatpush1.bf16.msra.mxu0 %v708
    %726 = vmatprep.subr.bf16.mxu0 0
    %727 = vmatpush1.bf16.msra.mxu0 %v709
    %728 = vmatprep.subr.bf16.mxu0 0
    %729 = vmatpush1.bf16.msra.mxu0 %v710
    %730 = vmatprep.subr.bf16.mxu0 0
    %731 = vmatpush1.bf16.msra.mxu0 %v711
    %732 = vmatprep.subr.bf16.mxu0 0
    %733 = vmatpush1.bf16.msra.mxu0 %v712
    %734 = vmatprep.subr.bf16.mxu0 0
    %735 = vmatpush1.bf16.msra.mxu0 %v713
    %736 = vmatprep.subr.bf16.mxu0 0
    %737 = vmatpush1.bf16.msra.mxu0 %v714
    %738 = vmatprep.subr.bf16.mxu0 0
    %739 = vmatpush1.bf16.msra.mxu0 %v715
    %740 = vmatprep.subr.bf16.mxu0 0
    %741 = vmatpush1.bf16.msra.mxu0 0
    %742 = vmatprep.subr.bf16.mxu0 0
    %743 = vmatpush1.bf16.msra.mxu0 0
    %744 = vmatprep.subr.bf16.mxu0 0
    %745 = vmatpush1.bf16.msra.mxu0 0
    %746 = vmatprep.subr.bf16.mxu0 0
    %747 = vmatpush1.bf16.msra.mxu0 0
    %748 = vmatprep.subr.bf16.mxu0 0
    %749 = vmatpush1.bf16.msra.mxu0 0
    %750 = vmatprep.subr.bf16.mxu0 0
    %751 = vmatpush1.bf16.msra.mxu0 0
    %752 = vmatprep.subr.bf16.mxu0 0
    %753 = vmatpush1.bf16.msra.mxu0 0
    %754 = vmatprep.subr.bf16.mxu0 0
    %755 = vmatpush1.bf16.msra.mxu0 0
    %756 = vmatprep.mubr.bf16.mxu0 0
    %757 = vmatmul.mubr.bf16.gmra.mrb[0].mxu0 %v652
    %v758 = vpop.f32.mrb[0].mxu0
    %v759 = vadd.f32 %v674, %v758
    %v760 = vpop.f32.mrb[0].mxu0
    %v761 = vpop.f32.mrb[0].mxu0
    %v762 = vadd.f32 %v674, %v761
    %v763 = vpop.f32.mrb[0].mxu0
    %764 = vdwg.mxu0
    %v765 = vpack.c.bf16 %v532, %v532
    %v766 = vld [vmem:[#allocation15] sm:$0xf]
    %v767 = vld [vmem:[#allocation15 + $0x4] sm:$0xf]
    %v768 = vld [vmem:[#allocation15 + $0x8] sm:$0xf]
    %v769 = vld [vmem:[#allocation15 + $0xc] sm:$0xf]
    %v770 = vld [vmem:[#allocation15 + $0x10] sm:$0xf]
    %v771 = vld [vmem:[#allocation15 + $0x14] sm:$0xf]
    %v772 = vld [vmem:[#allocation15 + $0x18] sm:$0xf]
    %v773 = vld [vmem:[#allocation15 + $0x1c] sm:$0xf]
    %v774 = vld [vmem:[#allocation15 + $0x20] sm:$0xf]
    %v775 = vld [vmem:[#allocation15 + $0x24] sm:$0xf]
    %v776 = vld [vmem:[#allocation15 + $0x28] sm:$0xf]
    %v777 = vld [vmem:[#allocation15 + $0x2c] sm:$0xf]
    %v778 = vld [vmem:[#allocation15 + $0x30] sm:$0xf]
    %v779 = vld [vmem:[#allocation15 + $0x34] sm:$0xf]
    %v780 = vld [vmem:[#allocation15 + $0x38] sm:$0xf]
    %v781 = vld [vmem:[#allocation15 + $0x3c] sm:$0xf]
    %v782 = vld [vmem:[%s14] sm:$0x1]
    %v784 = vlaneseq
    %v785 = vshrl.u32 %v784, 7
    %v786 = vsub.s32 0, %v785
    %v787 = vrot.slane %v782, %v786
    %v805 = vunpack.c.l.b16 %v766
    %v806 = vunpack.c.l.b16 %v767
    %v807 = vunpack.c.l.b16 %v768
    %v808 = vunpack.c.l.b16 %v769
    %v809 = vunpack.c.l.b16 %v770
    %v810 = vunpack.c.l.b16 %v771
    %v811 = vunpack.c.l.b16 %v772
    %v812 = vunpack.c.l.b16 %v773
    %v813 = vunpack.c.l.b16 %v774
    %v814 = vunpack.c.l.b16 %v775
    %v815 = vunpack.c.l.b16 %v776
    %v816 = vunpack.c.l.b16 %v777
    %v817 = vunpack.c.l.b16 %v778
    %v818 = vunpack.c.l.b16 %v779
    %v819 = vunpack.c.l.b16 %v780
    %v820 = vunpack.c.l.b16 %v781
    %v821 = vpack.c.b16 %v806, %v805
    %v822 = vpack.c.b16 %v808, %v807
    %v823 = vpack.c.b16 %v810, %v809
    %v824 = vpack.c.b16 %v812, %v811
    %v825 = vpack.c.b16 %v814, %v813
    %v826 = vpack.c.b16 %v816, %v815
    %v827 = vpack.c.b16 %v818, %v817
    %v828 = vpack.c.b16 %v820, %v819
    %837 = vmatprep.subr.bf16.mxu0 0
    %838 = vmatpush1.bf16.msra.mxu0 %v821
    %839 = vmatprep.subr.bf16.mxu0 0
    %840 = vmatpush1.bf16.msra.mxu0 %v822
    %841 = vmatprep.subr.bf16.mxu0 0
    %842 = vmatpush1.bf16.msra.mxu0 %v823
    %843 = vmatprep.subr.bf16.mxu0 0
    %844 = vmatpush1.bf16.msra.mxu0 %v824
    %845 = vmatprep.subr.bf16.mxu0 0
    %846 = vmatpush1.bf16.msra.mxu0 %v825
    %847 = vmatprep.subr.bf16.mxu0 0
    %848 = vmatpush1.bf16.msra.mxu0 %v826
    %849 = vmatprep.subr.bf16.mxu0 0
    %850 = vmatpush1.bf16.msra.mxu0 %v827
    %851 = vmatprep.subr.bf16.mxu0 0
    %852 = vmatpush1.bf16.msra.mxu0 %v828
    %853 = vmatprep.subr.bf16.mxu0 0
    %854 = vmatpush1.bf16.msra.mxu0 0
    %855 = vmatprep.subr.bf16.mxu0 0
    %856 = vmatpush1.bf16.msra.mxu0 0
    %857 = vmatprep.subr.bf16.mxu0 0
    %858 = vmatpush1.bf16.msra.mxu0 0
    %859 = vmatprep.subr.bf16.mxu0 0
    %860 = vmatpush1.bf16.msra.mxu0 0
    %861 = vmatprep.subr.bf16.mxu0 0
    %862 = vmatpush1.bf16.msra.mxu0 0
    %863 = vmatprep.subr.bf16.mxu0 0
    %864 = vmatpush1.bf16.msra.mxu0 0
    %865 = vmatprep.subr.bf16.mxu0 0
    %866 = vmatpush1.bf16.msra.mxu0 0
    %867 = vmatprep.subr.bf16.mxu0 0
    %868 = vmatpush1.bf16.msra.mxu0 0
    %869 = vmatprep.mubr.bf16.mxu0 0
    %870 = vmatmul.mubr.bf16.gmra.mrb[0].mxu0 %v765
    %v871 = vpop.f32.mrb[0].mxu0
    %v872 = vadd.f32 %v787, %v871
    %v873 = vpop.f32.mrb[0].mxu0
    %v874 = vpop.f32.mrb[0].mxu0
    %v875 = vpop.f32.mrb[0].mxu0
    %876 = vdwg.mxu0
    %v877 = vmax.f32 %v872, 0.0
    %v878 = vpack.c.bf16 %v877, %v877
    %v879 = vld [vmem:[#allocation16] sm:$0xf]
    %v880 = vld [vmem:[#allocation16 + $0x4] sm:$0xf]
    %v881 = vld [vmem:[#allocation16 + $0x8] sm:$0xf]
    %v882 = vld [vmem:[#allocation16 + $0xc] sm:$0xf]
    %v883 = vld [vmem:[#allocation16 + $0x10] sm:$0xf]
    %v884 = vld [vmem:[#allocation16 + $0x14] sm:$0xf]
    %v885 = vld [vmem:[#allocation16 + $0x18] sm:$0xf]
    %v886 = vld [vmem:[#allocation16 + $0x1c] sm:$0xf]
    %v887 = vld [vmem:[#allocation16 + $0x20] sm:$0xf]
    %v888 = vld [vmem:[#allocation16 + $0x24] sm:$0xf]
    %v889 = vld [vmem:[#allocation16 + $0x28] sm:$0xf]
    %v890 = vld [vmem:[#allocation16 + $0x2c] sm:$0xf]
    %v891 = vld [vmem:[#allocation16 + $0x30] sm:$0xf]
    %v892 = vld [vmem:[#allocation16 + $0x34] sm:$0xf]
    %v893 = vld [vmem:[#allocation16 + $0x38] sm:$0xf]
    %v894 = vld [vmem:[#allocation16 + $0x3c] sm:$0xf]
    %v895 = vld [vmem:[%s16] sm:$0x1]
    %v897 = vlaneseq
    %v898 = vshrl.u32 %v897, 7
    %v899 = vsub.s32 0, %v898
    %v900 = vrot.slane %v895, %v899
    %v918 = vunpack.c.l.b16 %v879
    %v919 = vunpack.c.l.b16 %v880
    %v920 = vunpack.c.l.b16 %v881
    %v921 = vunpack.c.l.b16 %v882
    %v922 = vunpack.c.l.b16 %v883
    %v923 = vunpack.c.l.b16 %v884
    %v924 = vunpack.c.l.b16 %v885
    %v925 = vunpack.c.l.b16 %v886
    %v926 = vunpack.c.l.b16 %v887
    %v927 = vunpack.c.l.b16 %v888
    %v928 = vunpack.c.l.b16 %v889
    %v929 = vunpack.c.l.b16 %v890
    %v930 = vunpack.c.l.b16 %v891
    %v931 = vunpack.c.l.b16 %v892
    %v932 = vunpack.c.l.b16 %v893
    %v933 = vunpack.c.l.b16 %v894
    %v934 = vpack.c.b16 %v919, %v918
    %v935 = vpack.c.b16 %v921, %v920
    %v936 = vpack.c.b16 %v923, %v922
    %v937 = vpack.c.b16 %v925, %v924
    %v938 = vpack.c.b16 %v927, %v926
    %v939 = vpack.c.b16 %v929, %v928
    %v940 = vpack.c.b16 %v931, %v930
    %v941 = vpack.c.b16 %v933, %v932
    %950 = vmatprep.subr.bf16.mxu0 0
    %951 = vmatpush1.bf16.msra.mxu0 %v934
    %952 = vmatprep.subr.bf16.mxu0 0
    %953 = vmatpush1.bf16.msra.mxu0 %v935
    %954 = vmatprep.subr.bf16.mxu0 0
    %955 = vmatpush1.bf16.msra.mxu0 %v936
    %956 = vmatprep.subr.bf16.mxu0 0
    %957 = vmatpush1.bf16.msra.mxu0 %v937
    %958 = vmatprep.subr.bf16.mxu0 0
    %959 = vmatpush1.bf16.msra.mxu0 %v938
    %960 = vmatprep.subr.bf16.mxu0 0
    %961 = vmatpush1.bf16.msra.mxu0 %v939
    %962 = vmatprep.subr.bf16.mxu0 0
    %963 = vmatpush1.bf16.msra.mxu0 %v940
    %964 = vmatprep.subr.bf16.mxu0 0
    %965 = vmatpush1.bf16.msra.mxu0 %v941
    %966 = vmatprep.subr.bf16.mxu0 0
    %967 = vmatpush1.bf16.msra.mxu0 0
    %968 = vmatprep.subr.bf16.mxu0 0
    %969 = vmatpush1.bf16.msra.mxu0 0
    %970 = vmatprep.subr.bf16.mxu0 0
    %971 = vmatpush1.bf16.msra.mxu0 0
    %972 = vmatprep.subr.bf16.mxu0 0
    %973 = vmatpush1.bf16.msra.mxu0 0
    %974 = vmatprep.subr.bf16.mxu0 0
    %975 = vmatpush1.bf16.msra.mxu0 0
    %976 = vmatprep.subr.bf16.mxu0 0
    %977 = vmatpush1.bf16.msra.mxu0 0
    %978 = vmatprep.subr.bf16.mxu0 0
    %979 = vmatpush1.bf16.msra.mxu0 0
    %980 = vmatprep.subr.bf16.mxu0 0
    %981 = vmatpush1.bf16.msra.mxu0 0
    %982 = vmatprep.mubr.bf16.mxu0 0
    %983 = vmatmul.mubr.bf16.gmra.mrb[0].mxu0 %v878
    %v984 = vpop.f32.mrb[0].mxu0
    %v985 = vadd.f32 %v900, %v984
    %v986 = vpop.f32.mrb[0].mxu0
    %v987 = vpop.f32.mrb[0].mxu0
    %v988 = vpop.f32.mrb[0].mxu0
    %989 = vdwg.mxu0
    %v990 = vmax.f32 %v985, 0.0
    %v991 = vpack.c.bf16 %v990, %v990
    %v992 = vld [vmem:[#allocation18] sm:$0xf]
    %v993 = vld [vmem:[#allocation18 + $0x4] sm:$0xf]
    %v994 = vld [vmem:[#allocation18 + $0x8] sm:$0xf]
    %v995 = vld [vmem:[#allocation18 + $0xc] sm:$0xf]
    %v996 = vld [vmem:[#allocation18 + $0x10] sm:$0xf]
    %v997 = vld [vmem:[#allocation18 + $0x14] sm:$0xf]
    %v998 = vld [vmem:[#allocation18 + $0x18] sm:$0xf]
    %v999 = vld [vmem:[#allocation18 + $0x1c] sm:$0xf]
    %v1000 = vld [vmem:[#allocation18 + $0x20] sm:$0xf]
    %v1001 = vld [vmem:[#allocation18 + $0x24] sm:$0xf]
    %v1002 = vld [vmem:[#allocation18 + $0x28] sm:$0xf]
    %v1003 = vld [vmem:[#allocation18 + $0x2c] sm:$0xf]
    %v1004 = vld [vmem:[#allocation18 + $0x30] sm:$0xf]
    %v1005 = vld [vmem:[#allocation18 + $0x34] sm:$0xf]
    %v1006 = vld [vmem:[#allocation18 + $0x38] sm:$0xf]
    %v1007 = vld [vmem:[#allocation18 + $0x3c] sm:$0xf]
    %v1008 = vld [vmem:[%s18] sm:$0x1]
    %v1010 = vlaneseq
    %v1011 = vshrl.u32 %v1010, 7
    %v1012 = vsub.s32 0, %v1011
    %v1013 = vrot.slane %v1008, %v1012
    %v1031 = vunpack.c.l.b16 %v992
    %v1032 = vunpack.c.l.b16 %v993
    %v1033 = vunpack.c.l.b16 %v994
    %v1034 = vunpack.c.l.b16 %v995
    %v1035 = vunpack.c.l.b16 %v996
    %v1036 = vunpack.c.l.b16 %v997
    %v1037 = vunpack.c.l.b16 %v998
    %v1038 = vunpack.c.l.b16 %v999
    %v1039 = vunpack.c.l.b16 %v1000
    %v1040 = vunpack.c.l.b16 %v1001
    %v1041 = vunpack.c.l.b16 %v1002
    %v1042 = vunpack.c.l.b16 %v1003
    %v1043 = vunpack.c.l.b16 %v1004
    %v1044 = vunpack.c.l.b16 %v1005
    %v1045 = vunpack.c.l.b16 %v1006
    %v1046 = vunpack.c.l.b16 %v1007
    %v1047 = vpack.c.b16 %v1032, %v1031
    %v1048 = vpack.c.b16 %v1034, %v1033
    %v1049 = vpack.c.b16 %v1036, %v1035
    %v1050 = vpack.c.b16 %v1038, %v1037
    %v1051 = vpack.c.b16 %v1040, %v1039
    %v1052 = vpack.c.b16 %v1042, %v1041
    %v1053 = vpack.c.b16 %v1044, %v1043
    %v1054 = vpack.c.b16 %v1046, %v1045
    %1063 = vmatprep.subr.bf16.mxu0 0
    %1064 = vmatpush1.bf16.msra.mxu0 %v1047
    %1065 = vmatprep.subr.bf16.mxu0 0
    %1066 = vmatpush1.bf16.msra.mxu0 %v1048
    %1067 = vmatprep.subr.bf16.mxu0 0
    %1068 = vmatpush1.bf16.msra.mxu0 %v1049
    %1069 = vmatprep.subr.bf16.mxu0 0
    %1070 = vmatpush1.bf16.msra.mxu0 %v1050
    %1071 = vmatprep.subr.bf16.mxu0 0
    %1072 = vmatpush1.bf16.msra.mxu0 %v1051
    %1073 = vmatprep.subr.bf16.mxu0 0
    %1074 = vmatpush1.bf16.msra.mxu0 %v1052
    %1075 = vmatprep.subr.bf16.mxu0 0
    %1076 = vmatpush1.bf16.msra.mxu0 %v1053
    %1077 = vmatprep.subr.bf16.mxu0 0
    %1078 = vmatpush1.bf16.msra.mxu0 %v1054
    %1079 = vmatprep.subr.bf16.mxu0 0
    %1080 = vmatpush1.bf16.msra.mxu0 0
    %1081 = vmatprep.subr.bf16.mxu0 0
    %1082 = vmatpush1.bf16.msra.mxu0 0
    %1083 = vmatprep.subr.bf16.mxu0 0
    %1084 = vmatpush1.bf16.msra.mxu0 0
    %1085 = vmatprep.subr.bf16.mxu0 0
    %1086 = vmatpush1.bf16.msra.mxu0 0
    %1087 = vmatprep.subr.bf16.mxu0 0
    %1088 = vmatpush1.bf16.msra.mxu0 0
    %1089 = vmatprep.subr.bf16.mxu0 0
    %1090 = vmatpush1.bf16.msra.mxu0 0
    %1091 = vmatprep.subr.bf16.mxu0 0
    %1092 = vmatpush1.bf16.msra.mxu0 0
    %1093 = vmatprep.subr.bf16.mxu0 0
    %1094 = vmatpush1.bf16.msra.mxu0 0
    %1095 = vmatprep.mubr.bf16.mxu0 0
    %1096 = vmatmul.mubr.bf16.gmra.mrb[0].mxu0 %v991
    %v1097 = vpop.f32.mrb[0].mxu0
    %v1098 = vadd.f32 %v1013, %v1097
    %v1099 = vpop.f32.mrb[0].mxu0
    %v1100 = vpop.f32.mrb[0].mxu0
    %v1101 = vpop.f32.mrb[0].mxu0
    %1102 = vdwg.mxu0
    %1103 = vst [vmem:[%s19] sm:$0xff] %v524
    %1104 = vst [vmem:[%s19 + $0x8] sm:$0xff] %v527
    %1105 = vst [vmem:[%s19 + $0x10] sm:$0xff] %v759
    %1106 = vst [vmem:[%s19 + $0x18] sm:$0xff] %v762
    %1107 = vst [vmem:[%s19 + $0x20] sm:$0xff] %v1098
    // Predicated region
    $region122: #{enhanced_autoencoder_forward.1} parent=1 // pred_check
      _
    $region123: #{enhanced_autoencoder_forward.1} parent=1 // pred_check_branch
      %1109 = sbr.rel (0) target = $region125
    $region124: #{enhanced_autoencoder_forward.1} parent=1 // pred_region
      _
    $region125: #{enhanced_autoencoder_forward.1} parent=1 // pred_fallthru
      _
    // Predicated region
    $region126: #{enhanced_autoencoder_forward.1} parent=1 // pred_check
      _
    $region127: #{enhanced_autoencoder_forward.1} parent=1 // pred_check_branch
      %1111 = sbr.rel (0) target = $region129
    $region128: #{enhanced_autoencoder_forward.1} parent=1 // pred_region
      _
    $region129: #{enhanced_autoencoder_forward.1} parent=1 // pred_fallthru
      _
    %1112 = vsyncpa [#allocation3], 1
    %1113 = vsyncpa [#allocation5], 1
    %1114 = vsyncpa [#allocation8], 1
    %1115 = vsyncpa [#allocation11], 1
    %1116 = vsyncpa [#allocation14], 1
    %1117 = vsyncpa [#allocation17], 1

</llo_original>
